<compile_context>
chip_gen: v6e
topology: v6e:2x2x1
jax: 0.10.0
libtpu: 0.0.40
codegen_flags: <defaults>
</compile_context>

<pallas_src>
import functools

import jax
import jax.numpy as jnp
from jax import lax
from jax.experimental import pallas as pl
from jax.experimental.pallas import tpu as pltpu


# --------------------------------------------------------------------------
# Shared helpers
# --------------------------------------------------------------------------

_LN_EPS = 1e-5  # torch.nn.LayerNorm default


def _gelu_tanh(x):
    c = 0.7978845608028654  # sqrt(2 / pi)
    return 0.5 * x * (1.0 + jnp.tanh(c * (x + 0.044715 * (x * x * x))))


def _layernorm(x, gamma, beta, eps=_LN_EPS):
    mu = jnp.mean(x, axis=-1, keepdims=True)
    var = jnp.mean(jnp.square(x - mu), axis=-1, keepdims=True)
    return (x - mu) * lax.rsqrt(var + eps) * gamma + beta


def _pick_divisor_tile(n, target):
    """Largest multiple-of-8 divisor of n that is <= target, else n (no tiling)."""
    if n <= target:
        return n
    t = (min(target, n) // 8) * 8
    while t >= 8:
        if n % t == 0:
            return t
        t -= 8
    return n


def _pick_row_tile(n, target):
    """Row tile for the FFN: multiple-of-8 divisor near target if possible,
    else the multiple-of-8 target itself (last block is then padded; Pallas
    masks the out-of-range rows on writeback)."""
    if n <= target:
        return n
    t = max(8, (target // 8) * 8)
    d = t
    while d >= 8:
        if n % d == 0:
            return d
        d -= 8
    return t


def _clamp_vmem(nbytes):
    # Explicit scoped-VMEM request (2x headroom over the accounting), at
    # least 32 MiB and at most 64 MiB so one setting is valid on v5e/v6e
    # (128 MiB physical) and v7x (64 MiB physical).
    return int(min(max(2 * int(nbytes), 32 * 1024 * 1024), 64 * 1024 * 1024))


# --------------------------------------------------------------------------
# Kernel 1: fused PreNorm + Attention (+ residual), grid = (B, N // tq)
# --------------------------------------------------------------------------

def _attn_block_kernel(x_ref, g_ref, b_ref, wq_ref, wk_ref, wv_ref, *rest,
                       heads, dim_head, eps, transpose_x, project_out, tq):
    if project_out:
        wo_ref, wob_ref = rest[:2]
        rest = rest[2:]
    o_ref, k_scr, v_scr, o_scr = rest[:4]
    xt_scr = rest[4] if transpose_x else None

    qi = pl.program_id(1)
    g = g_ref[...]
    bb = b_ref[...]

    # K/V for the full token set, computed once per batch element and kept
    # resident (bf16) in VMEM scratch across all q tiles.
    @pl.when(qi == 0)
    def _():
        xf = x_ref[...]
        if transpose_x:
            # Fuse the Transformer's leading `x.transpose(1, 2)`: on-chip
            # XLU transpose of the (D, N) slab -> (N, D).
            xf = xf.T
        xf = xf.astype(jnp.float32)                              # (N, D)
        if transpose_x:
            xt_scr[...] = xf                                     # for residual / q rows
        xn = _layernorm(xf, g, bb, eps).astype(jnp.bfloat16)
        k_scr[...] = jnp.dot(xn, wk_ref[...],
                             preferred_element_type=jnp.float32).astype(jnp.bfloat16)
        v_scr[...] = jnp.dot(xn, wv_ref[...],
                             preferred_element_type=jnp.float32).astype(jnp.bfloat16)

    # Current q-row tile (residual + LayerNorm recomputed for these rows only).
    row0 = pl.multiple_of(qi * tq, tq)
    rows = pl.ds(row0, tq)
    if transpose_x:
        xr = xt_scr[rows, :]                                     # (tq, D) f32
    else:
        xr = x_ref[rows, :].astype(jnp.float32)
    xnr = _layernorm(xr, g, bb, eps).astype(jnp.bfloat16)
    # Softmax scale is folded into Wq in the wrapper; bf16 MXU, f32 accum.
    q = jnp.dot(xnr, wq_ref[...],
                preferred_element_type=jnp.float32).astype(jnp.bfloat16)

    # Per-head attention (heads is small & static -> unrolled); each head's
    # output lands in the (tq, inner) scratch slab for one final projection.
    for h in range(heads):
        lo, hi = h * dim_head, (h + 1) * dim_head
        s = lax.dot_general(q[:, lo:hi], k_scr[:, lo:hi],
                            (((1,), (1,)), ((), ())),
                            preferred_element_type=jnp.float32)   # (tq, N)
        s = s - jnp.max(s, axis=-1, keepdims=True)
        p = jnp.exp(s)
        p = p * pl.reciprocal(jnp.sum(p, axis=-1, keepdims=True), approx=True)
        o_scr[:, lo:hi] = jnp.dot(p.astype(jnp.bfloat16), v_scr[:, lo:hi],
                                  preferred_element_type=jnp.float32)

    o = o_scr[...]
    if project_out:
        # Single K=inner output projection (fills the MXU) + bias, once.
        y = jnp.dot(o.astype(jnp.bfloat16), wo_ref[...],
                    preferred_element_type=jnp.float32) + wob_ref[...]
    else:
        y = o  # nn.Identity(): skip the matmul entirely.

    # Residual add; lane-dense (tq, D) write.
    o_ref[...] = (y + xr).astype(o_ref.dtype)


def _attn_vmem_estimate(N, D, inner, tq, itemsize, transpose_x, project_out):
    weights = 3 * D * inner * 2 + 2 * D * 4                       # Wq/Wk/Wv bf16 + LN
    if project_out:
        weights += inner * D * 2 + D * 4                          # Wo bf16 + bias
    io = 2 * N * D * itemsize + 2 * tq * D * itemsize             # double-buffered x / out
    scratch = 2 * N * inner * 2 + tq * inner * 4
    if transpose_x:
        scratch += N * D * 4
    live = (2 * N * D * 4 + 2 * N * inner * 4                     # qi==0 LN + K/V projections
            + 3 * tq * N * 4                                      # per-head scores / probs
            + 2 * tq * D * 4 + 2 * tq * inner * 4)
    return 2 * weights + io + scratch + live


def _attn_block(x, ln_g, ln_b, wq, wk, wv, wo, wo_b, *, heads, dim_head,
                transpose_x, project_out, max_q_tile=256):
    if transpose_x:
        B, D, N = x.shape
        x_spec = pl.BlockSpec((pl.Squeezed(), D, N), lambda b, qi: (b, 0, 0))
    else:
        B, N, D = x.shape
        x_spec = pl.BlockSpec((pl.Squeezed(), N, D), lambda b, qi: (b, 0, 0))
    inner = heads * dim_head

    # Query-row tiling caps the per-step score tile at (tq, N); tq must be a
    # multiple of 8 (or all of N).
    tq = _pick_divisor_tile(N, max_q_tile)
    grid_q = N // tq

    kernel = functools.partial(
        _attn_block_kernel, heads=heads, dim_head=dim_head, eps=_LN_EPS,
        transpose_x=transpose_x, project_out=project_out, tq=tq)

    wmap = lambda b, qi: (0, 0)
    in_specs = [
        x_spec,
        pl.BlockSpec((1, D), wmap),               # ln gamma
        pl.BlockSpec((1, D), wmap),               # ln beta
        pl.BlockSpec((D, inner), wmap),           # Wq (bf16, scale folded)
        pl.BlockSpec((D, inner), wmap),           # Wk (bf16)
        pl.BlockSpec((D, inner), wmap),           # Wv (bf16)
    ]
    args = [x, ln_g, ln_b, wq, wk, wv]
    if project_out:
        in_specs += [pl.BlockSpec((inner, D), wmap),   # Wo (bf16)
                     pl.BlockSpec((1, D), wmap)]       # Wo bias (f32)
        args += [wo, wo_b]

    scratch = [pltpu.VMEM((N, inner), jnp.bfloat16),   # K
               pltpu.VMEM((N, inner), jnp.bfloat16),   # V
               pltpu.VMEM((tq, inner), jnp.float32)]   # per-head output slab
    if transpose_x:
        scratch.append(pltpu.VMEM((N, D), jnp.float32))  # transposed x (residual/q rows)

    est = _attn_vmem_estimate(N, D, inner, tq, x.dtype.itemsize,
                              transpose_x, project_out)

    return pl.pallas_call(
        kernel,
        out_shape=jax.ShapeDtypeStruct((B, N, D), x.dtype),
        grid_spec=pltpu.PrefetchScalarGridSpec(
            num_scalar_prefetch=0,
            grid=(B, grid_q),
            in_specs=in_specs,
            out_specs=pl.BlockSpec((pl.Squeezed(), tq, D),
                                   lambda b, qi: (b, qi, 0)),
            scratch_shapes=scratch,
        ),
        compiler_params=pltpu.CompilerParams(
            # The q-tile axis carries the resident K/V scratch -> "arbitrary".
            dimension_semantics=("parallel", "arbitrary"),
            vmem_limit_bytes=_clamp_vmem(est),
        ),
    )(*args)


# --------------------------------------------------------------------------
# Kernel 2: fused PreNorm + FeedForward (+ residual), row-tiled over B*N
# --------------------------------------------------------------------------

def _ffn_block_kernel(x_ref, g_ref, b_ref, w1_ref, b1_ref, w2_ref, b2_ref,
                      o_ref, *, eps):
    x = x_ref[...].astype(jnp.float32)                            # (rows, D)
    xn = _layernorm(x, g_ref[...], b_ref[...], eps).astype(jnp.bfloat16)
    h = jnp.dot(xn, w1_ref[...], preferred_element_type=jnp.float32) + b1_ref[...]
    h = _gelu_tanh(h).astype(jnp.bfloat16)
    y = jnp.dot(h, w2_ref[...], preferred_element_type=jnp.float32) + b2_ref[...]
    o_ref[...] = (y + x).astype(o_ref.dtype)


def _ffn_vmem_estimate(rows, D, M, itemsize):
    weights = 2 * D * M * 2 + (2 * D + M + D) * 4                 # W1/W2 bf16 + LN + biases
    io = 2 * rows * D * itemsize * 2                              # double-buffered in / out
    live = rows * M * 4 + rows * M * 2 + 2 * rows * D * 4 + rows * D * 2
    return 2 * weights + io + live


def _ffn_block(x2d, ln_g, ln_b, w1, b1, w2, b2, *, vmem_budget=40 * 1024 * 1024):
    R, D = x2d.shape
    M = w1.shape[1]
    itemsize = x2d.dtype.itemsize

    # Pick the largest row tile whose working set fits the budget (amortizes
    # the ~0.35us per-step overhead; bigger tiles on 128 MiB parts, still
    # safe for v7x's 64 MiB VMEM).
    rows = 8
    for cand in (2048, 1024, 512, 256, 128, 64, 32, 16, 8):
        if _ffn_vmem_estimate(cand, D, M, itemsize) <= vmem_budget:
            rows = cand
            break
    tile_r = _pick_row_tile(R, rows)
    grid_r = pl.cdiv(R, tile_r)

    kernel = functools.partial(_ffn_block_kernel, eps=_LN_EPS)
    return pl.pallas_call(
        kernel,
        out_shape=jax.ShapeDtypeStruct((R, D), x2d.dtype),
        grid_spec=pltpu.PrefetchScalarGridSpec(
            num_scalar_prefetch=0,
            grid=(grid_r,),
            in_specs=[
                pl.BlockSpec((tile_r, D), lambda r: (r, 0)),
                pl.BlockSpec((1, D), lambda r: (0, 0)),   # ln gamma
                pl.BlockSpec((1, D), lambda r: (0, 0)),   # ln beta
                pl.BlockSpec((D, M), lambda r: (0, 0)),   # W1 (bf16)
                pl.BlockSpec((1, M), lambda r: (0, 0)),   # b1 (f32)
                pl.BlockSpec((M, D), lambda r: (0, 0)),   # W2 (bf16)
                pl.BlockSpec((1, D), lambda r: (0, 0)),   # b2 (f32)
            ],
            out_specs=pl.BlockSpec((tile_r, D), lambda r: (r, 0)),
        ),
        compiler_params=pltpu.CompilerParams(
            dimension_semantics=("parallel",),
            vmem_limit_bytes=_clamp_vmem(_ffn_vmem_estimate(tile_r, D, M, itemsize)),
        ),
    )(x2d, ln_g, ln_b, w1, b1, w2, b2)


# --------------------------------------------------------------------------
# Transformer module (mirrors the PyTorch class, inference mode)
# --------------------------------------------------------------------------

class Transformer:
    def __init__(self, hidden_size, depth, heads, dim_head, mlp_dim,
                 tokenlearner=None, tokenlearner_loc=-1, fuse=None,
                 dropout=0.0, *, key):
        self.hidden_size = hidden_size
        self.heads = heads
        self.dim_head = dim_head
        self.tokenlearner = tokenlearner
        self.tokenlearner_loc = tokenlearner_loc
        self.fuse = fuse
        # dropout == 0 / eval mode: all dropout layers are identities.

        inner = heads * dim_head
        self.project_out = not (heads == 1 and dim_head == hidden_size)
        scale = dim_head ** -0.5

        layers = []
        for _ in range(depth):
            key, kq, kk, kv, kwo, kwob, kw1, kb1, kw2, kb2 = jax.random.split(key, 10)
            wq = jax.random.normal(kq, (hidden_size, inner), jnp.float32) * hidden_size ** -0.5
            wk = jax.random.normal(kk, (hidden_size, inner), jnp.float32) * hidden_size ** -0.5
            wv = jax.random.normal(kv, (hidden_size, inner), jnp.float32) * hidden_size ** -0.5
            p = dict(
                ln1_g=jnp.ones((1, hidden_size), jnp.float32),
                ln1_b=jnp.zeros((1, hidden_size), jnp.float32),
                # bf16 MXU weights; softmax scale folded into Wq once.
                wq=(wq * scale).astype(jnp.bfloat16),
                wk=wk.astype(jnp.bfloat16),
                wv=wv.astype(jnp.bfloat16),
                ln2_g=jnp.ones((1, hidden_size), jnp.float32),
                ln2_b=jnp.zeros((1, hidden_size), jnp.float32),
                w1=(jax.random.normal(kw1, (hidden_size, mlp_dim), jnp.float32)
                    * hidden_size ** -0.5).astype(jnp.bfloat16),
                b1=0.02 * jax.random.normal(kb1, (1, mlp_dim), jnp.float32),
                w2=(jax.random.normal(kw2, (mlp_dim, hidden_size), jnp.float32)
                    * mlp_dim ** -0.5).astype(jnp.bfloat16),
                b2=0.02 * jax.random.normal(kb2, (1, hidden_size), jnp.float32),
            )
            if self.project_out:
                p["wo"] = (jax.random.normal(kwo, (inner, hidden_size), jnp.float32)
                           * inner ** -0.5).astype(jnp.bfloat16)
                p["wo_b"] = 0.02 * jax.random.normal(kwob, (1, hidden_size), jnp.float32)
            else:  # nn.Identity(): projection is skipped entirely in the kernel.
                p["wo"] = None
                p["wo_b"] = None
            layers.append(p)
        self.layers = layers

    def __call__(self, x):
        """x: [B, hidden_size, length] -> [B, length, hidden_size]."""
        assert x.ndim == 3
        if not self.layers:
            return jnp.swapaxes(x, 1, 2)  # degenerate depth-0 case
        for i, p in enumerate(self.layers):
            if i == self.tokenlearner_loc and self.tokenlearner is not None:
                # TODO(synk): TokenLearnerModule / TokenFuser (3x3 convs,
                # sigmoid pooling) have no Pallas kernel here; not faked.
                raise NotImplementedError("TokenLearner/TokenFuser path")
            # PreNorm + Attention + residual.  Layer 0 fuses the module's
            # leading transpose(1, 2) into this kernel (no HBM round trip).
            x = _attn_block(x, p["ln1_g"], p["ln1_b"], p["wq"], p["wk"], p["wv"],
                            p["wo"], p["wo_b"],
                            heads=self.heads, dim_head=self.dim_head,
                            transpose_x=(i == 0), project_out=self.project_out)
            # PreNorm + FeedForward + residual on the flattened token rows.
            B, N, D = x.shape
            x = _ffn_block(x.reshape(B * N, D), p["ln2_g"], p["ln2_b"],
                           p["w1"], p["b1"], p["w2"], p["b2"]).reshape(B, N, D)
        return x


# --------------------------------------------------------------------------
# Pure-JAX reference (same math, same bf16 rounding points) for self-check
# --------------------------------------------------------------------------

def _reference_forward(x, layers, heads, dim_head):
    f32 = jnp.float32
    x = jnp.swapaxes(x, 1, 2).astype(f32)
    inner = heads * dim_head
    for p in layers:
        xn = _layernorm(x, p["ln1_g"], p["ln1_b"]).astype(jnp.bfloat16)
        q = jnp.dot(xn, p["wq"], preferred_element_type=f32)   # scale already folded
        k = jnp.dot(xn, p["wk"], preferred_element_type=f32)
        v = jnp.dot(xn, p["wv"], preferred_element_type=f32)
        B, N, _ = q.shape
        qh = q.reshape(B, N, heads, dim_head).transpose(0, 2, 1, 3).astype(jnp.bfloat16)
        kh = k.reshape(B, N, heads, dim_head).transpose(0, 2, 1, 3).astype(jnp.bfloat16)
        vh = v.reshape(B, N, heads, dim_head).transpose(0, 2, 1, 3).astype(jnp.bfloat16)
        dots = jnp.einsum("bhnd,bhmd->bhnm", qh, kh, preferred_element_type=f32)
        attn = jax.nn.softmax(dots, axis=-1)
        out = jnp.einsum("bhnm,bhmd->bhnd", attn.astype(jnp.bfloat16), vh,
                         preferred_element_type=f32)
        out = out.transpose(0, 2, 1, 3).reshape(B, N, inner)
        if p["wo"] is not None:
            out = jnp.dot(out.astype(jnp.bfloat16), p["wo"],
                          preferred_element_type=f32) + p["wo_b"]
        x = x + out
        xn2 = _layernorm(x, p["ln2_g"], p["ln2_b"]).astype(jnp.bfloat16)
        h = jnp.dot(xn2, p["w1"], preferred_element_type=f32) + p["b1"]
        h = _gelu_tanh(h).astype(jnp.bfloat16)
        x = x + jnp.dot(h, p["w2"], preferred_element_type=f32) + p["b2"]
    return x


# --------------------------------------------------------------------------
# Demo / self-check
# --------------------------------------------------------------------------

if __name__ == "__main__":
    key = jax.random.PRNGKey(0)
    B, hidden, length = 2, 32, 64
    depth, heads, dim_head, mlp_dim = 2, 2, 16, 64

    key, kx, kp = jax.random.split(key, 3)
    x = jax.random.normal(kx, (B, hidden, length), dtype=jnp.float32)

    model = Transformer(hidden, depth, heads, dim_head, mlp_dim,
                        tokenlearner=None, tokenlearner_loc=-1, fuse=None,
                        dropout=0.0, key=kp)

    y = jax.block_until_ready(model(x))
    ref = _reference_forward(x, model.layers, heads, dim_head)

    assert y.shape == (B, length, hidden), y.shape
    assert y.dtype == x.dtype
    err = float(jnp.max(jnp.abs(y - ref)))
    assert jnp.allclose(y, ref, atol=2e-2, rtol=2e-2), f"max abs err {err}"

    print("KERNEL_OK")
</pallas_src>

<mosaic_0001>
module attributes {stable_mosaic.version = 11 : i64} {
  func.func @_attn_block_kernel(%arg0: i32, %arg1: i32, %arg2: memref<1x32x64xf32, #tpu.memory_space<vmem>>, %arg3: memref<1x32xf32, #tpu.memory_space<vmem>>, %arg4: memref<1x32xf32, #tpu.memory_space<vmem>>, %arg5: memref<32x32xbf16, #tpu.memory_space<vmem>>, %arg6: memref<32x32xbf16, #tpu.memory_space<vmem>>, %arg7: memref<32x32xbf16, #tpu.memory_space<vmem>>, %arg8: memref<32x32xbf16, #tpu.memory_space<vmem>>, %arg9: memref<1x32xf32, #tpu.memory_space<vmem>>, %arg10: memref<1x64x32xf32, #tpu.memory_space<vmem>>, %arg11: memref<64x32xbf16, #tpu.memory_space<vmem>>, %arg12: memref<64x32xbf16, #tpu.memory_space<vmem>>, %arg13: memref<64x32xf32, #tpu.memory_space<vmem>>, %arg14: memref<64x32xf32, #tpu.memory_space<vmem>>) attributes {dimension_semantics = [#tpu.dimension_semantics<parallel>, #tpu.dimension_semantics<arbitrary>], iteration_bounds = array<i64: 2, 1>, scalar_prefetch = 0 : i64, scratch_operands = 4 : i64, tpu.core_type = #tpu.core_type<tc>, window_params = [{transform_indices = @transform_0, window_bounds = array<i64: 1, 32, 64>}, {pipeline_mode = #tpu.pipeline_mode<synchronous>, transform_indices = @transform_1, window_bounds = array<i64: 1, 32>}, {pipeline_mode = #tpu.pipeline_mode<synchronous>, transform_indices = @transform_2, window_bounds = array<i64: 1, 32>}, {pipeline_mode = #tpu.pipeline_mode<synchronous>, transform_indices = @transform_3, window_bounds = array<i64: 32, 32>}, {pipeline_mode = #tpu.pipeline_mode<synchronous>, transform_indices = @transform_4, window_bounds = array<i64: 32, 32>}, {pipeline_mode = #tpu.pipeline_mode<synchronous>, transform_indices = @transform_5, window_bounds = array<i64: 32, 32>}, {pipeline_mode = #tpu.pipeline_mode<synchronous>, transform_indices = @transform_6, window_bounds = array<i64: 32, 32>}, {pipeline_mode = #tpu.pipeline_mode<synchronous>, transform_indices = @transform_7, window_bounds = array<i64: 1, 32>}, {transform_indices = @transform_8, window_bounds = array<i64: 1, 64, 32>}]} {
    %c0 = arith.constant 0 : index
    %c0_0 = arith.constant 0 : index
    %0 = vector.load %arg3[%c0, %c0_0] : memref<1x32xf32, #tpu.memory_space<vmem>>, vector<1x32xf32>
    %c0_1 = arith.constant 0 : index
    %c0_2 = arith.constant 0 : index
    %1 = vector.load %arg4[%c0_1, %c0_2] : memref<1x32xf32, #tpu.memory_space<vmem>>, vector<1x32xf32>
    %c0_i32 = arith.constant 0 : i32
    %2 = arith.cmpi eq, %arg1, %c0_i32 : i32
    %3 = arith.extui %2 : i1 to i32
    %c0_i32_3 = arith.constant 0 : i32
    %4 = arith.cmpi ne, %3, %c0_i32_3 : i32
    scf.if %4 {
      %c0_41 = arith.constant 0 : index
      %c0_42 = arith.constant 0 : index
      %c0_43 = arith.constant 0 : index
      %80 = vector.load %arg2[%c0_41, %c0_42, %c0_43] : memref<1x32x64xf32, #tpu.memory_space<vmem>>, vector<1x32x64xf32>
      %81 = vector.shape_cast %80 : vector<1x32x64xf32> to vector<32x64xf32>
      %82 = tpu.transpose %81, [1, 0] : vector<32x64xf32> -> vector<64x32xf32>
      %c0_44 = arith.constant 0 : index
      %c0_45 = arith.constant 0 : index
      %83 = vector.load %arg14[%c0_44, %c0_45] : memref<64x32xf32, #tpu.memory_space<vmem>>, vector<64x32xf32>
      tpu.vector_store %arg14[%c0_44, %c0_45], %82 {strides = array<i32>} : memref<64x32xf32, #tpu.memory_space<vmem>>, vector<64x32xf32>,
      %cst_46 = arith.constant dense<0.000000e+00> : vector<64xf32>
      %84 = vector.multi_reduction <add>, %82, %cst_46 [1] : vector<64x32xf32> to vector<64xf32>
      %85 = vector.shape_cast %84 : vector<64xf32> to vector<64x1xf32>
      %cst_47 = arith.constant 3.200000e+01 : f32
      %86 = vector.broadcast %cst_47 : f32 to vector<64x1xf32>
      %87 = arith.divf %85, %86 : vector<64x1xf32>
      %88 = vector.broadcast %87 : vector<64x1xf32> to vector<64x32xf32>
      %89 = arith.subf %82, %88 : vector<64x32xf32>
      %90 = arith.mulf %89, %89 : vector<64x32xf32>
      %cst_48 = arith.constant dense<0.000000e+00> : vector<64xf32>
      %91 = vector.multi_reduction <add>, %90, %cst_48 [1] : vector<64x32xf32> to vector<64xf32>
      %92 = vector.shape_cast %91 : vector<64xf32> to vector<64x1xf32>
      %cst_49 = arith.constant 3.200000e+01 : f32
      %93 = vector.broadcast %cst_49 : f32 to vector<64x1xf32>
      %94 = arith.divf %92, %93 : vector<64x1xf32>
      %95 = vector.broadcast %87 : vector<64x1xf32> to vector<64x32xf32>
      %96 = arith.subf %82, %95 : vector<64x32xf32>
      %cst_50 = arith.constant 9.99999974E-6 : f32
      %97 = vector.broadcast %cst_50 : f32 to vector<64x1xf32>
      %98 = arith.addf %94, %97 : vector<64x1xf32>
      %99 = math.rsqrt %98 : vector<64x1xf32>
      %100 = vector.broadcast %99 : vector<64x1xf32> to vector<64x32xf32>
      %101 = arith.mulf %96, %100 : vector<64x32xf32>
      %102 = vector.broadcast %0 : vector<1x32xf32> to vector<64x32xf32>
      %103 = arith.mulf %101, %102 : vector<64x32xf32>
      %104 = vector.broadcast %1 : vector<1x32xf32> to vector<64x32xf32>
      %105 = arith.addf %103, %104 : vector<64x32xf32>
      %106 = arith.truncf %105 : vector<64x32xf32> to vector<64x32xbf16>
      %c0_51 = arith.constant 0 : index
      %c0_52 = arith.constant 0 : index
      %107 = vector.load %arg6[%c0_51, %c0_52] : memref<32x32xbf16, #tpu.memory_space<vmem>>, vector<32x32xbf16>
      %cst_53 = arith.constant dense<0.000000e+00> : vector<64x32xf32>
      %108 = tpu.matmul %106, %107, %cst_53 {dimension_numbers = #tpu.dot_dimension_numbers<[1], [0], [0], [1], [0, 0, 1, 1], [], []>} : vector<64x32xbf16>, vector<32x32xbf16>, vector<64x32xf32> -> vector<64x32xf32>
      %109 = arith.truncf %108 : vector<64x32xf32> to vector<64x32xbf16>
      %c0_54 = arith.constant 0 : index
      %c0_55 = arith.constant 0 : index
      %110 = vector.load %arg11[%c0_54, %c0_55] : memref<64x32xbf16, #tpu.memory_space<vmem>>, vector<64x32xbf16>
      tpu.vector_store %arg11[%c0_54, %c0_55], %109 {strides = array<i32>} : memref<64x32xbf16, #tpu.memory_space<vmem>>, vector<64x32xbf16>,
      %c0_56 = arith.constant 0 : index
      %c0_57 = arith.constant 0 : index
      %111 = vector.load %arg7[%c0_56, %c0_57] : memref<32x32xbf16, #tpu.memory_space<vmem>>, vector<32x32xbf16>
      %cst_58 = arith.constant dense<0.000000e+00> : vector<64x32xf32>
      %112 = tpu.matmul %106, %111, %cst_58 {dimension_numbers = #tpu.dot_dimension_numbers<[1], [0], [0], [1], [0, 0, 1, 1], [], []>} : vector<64x32xbf16>, vector<32x32xbf16>, vector<64x32xf32> -> vector<64x32xf32>
      %113 = arith.truncf %112 : vector<64x32xf32> to vector<64x32xbf16>
      %c0_59 = arith.constant 0 : index
      %c0_60 = arith.constant 0 : index
      %114 = vector.load %arg12[%c0_59, %c0_60] : memref<64x32xbf16, #tpu.memory_space<vmem>>, vector<64x32xbf16>
      tpu.vector_store %arg12[%c0_59, %c0_60], %113 {strides = array<i32>} : memref<64x32xbf16, #tpu.memory_space<vmem>>, vector<64x32xbf16>,
    } else {
    }
    %c64_i32 = arith.constant 64 : i32
    %5 = arith.muli %arg1, %c64_i32 : i32
    %6 = tpu.assume_multiple %5, 64 : i32
    %7 = arith.index_cast %6 : i32 to index
    %c0_4 = arith.constant 0 : index
    %8 = vector.load %arg14[%7, %c0_4] : memref<64x32xf32, #tpu.memory_space<vmem>>, vector<64x32xf32>
    %cst = arith.constant dense<0.000000e+00> : vector<64xf32>
    %9 = vector.multi_reduction <add>, %8, %cst [1] : vector<64x32xf32> to vector<64xf32>
    %10 = vector.shape_cast %9 : vector<64xf32> to vector<64x1xf32>
    %cst_5 = arith.constant 3.200000e+01 : f32
    %11 = vector.broadcast %cst_5 : f32 to vector<64x1xf32>
    %12 = arith.divf %10, %11 : vector<64x1xf32>
    %13 = vector.broadcast %12 : vector<64x1xf32> to vector<64x32xf32>
    %14 = arith.subf %8, %13 : vector<64x32xf32>
    %15 = arith.mulf %14, %14 : vector<64x32xf32>
    %cst_6 = arith.constant dense<0.000000e+00> : vector<64xf32>
    %16 = vector.multi_reduction <add>, %15, %cst_6 [1] : vector<64x32xf32> to vector<64xf32>
    %17 = vector.shape_cast %16 : vector<64xf32> to vector<64x1xf32>
    %cst_7 = arith.constant 3.200000e+01 : f32
    %18 = vector.broadcast %cst_7 : f32 to vector<64x1xf32>
    %19 = arith.divf %17, %18 : vector<64x1xf32>
    %20 = vector.broadcast %12 : vector<64x1xf32> to vector<64x32xf32>
    %21 = arith.subf %8, %20 : vector<64x32xf32>
    %cst_8 = arith.constant 9.99999974E-6 : f32
    %22 = vector.broadcast %cst_8 : f32 to vector<64x1xf32>
    %23 = arith.addf %19, %22 : vector<64x1xf32>
    %24 = math.rsqrt %23 : vector<64x1xf32>
    %25 = vector.broadcast %24 : vector<64x1xf32> to vector<64x32xf32>
    %26 = arith.mulf %21, %25 : vector<64x32xf32>
    %27 = vector.broadcast %0 : vector<1x32xf32> to vector<64x32xf32>
    %28 = arith.mulf %26, %27 : vector<64x32xf32>
    %29 = vector.broadcast %1 : vector<1x32xf32> to vector<64x32xf32>
    %30 = arith.addf %28, %29 : vector<64x32xf32>
    %31 = arith.truncf %30 : vector<64x32xf32> to vector<64x32xbf16>
    %c0_9 = arith.constant 0 : index
    %c0_10 = arith.constant 0 : index
    %32 = vector.load %arg5[%c0_9, %c0_10] : memref<32x32xbf16, #tpu.memory_space<vmem>>, vector<32x32xbf16>
    %cst_11 = arith.constant dense<0.000000e+00> : vector<64x32xf32>
    %33 = tpu.matmul %31, %32, %cst_11 {dimension_numbers = #tpu.dot_dimension_numbers<[1], [0], [0], [1], [0, 0, 1, 1], [], []>} : vector<64x32xbf16>, vector<32x32xbf16>, vector<64x32xf32> -> vector<64x32xf32>
    %34 = arith.truncf %33 : vector<64x32xf32> to vector<64x32xbf16>
    %35 = vector.extract_strided_slice %34 {offsets = [0, 0], sizes = [64, 16], strides = [1, 1]} : vector<64x32xbf16> to vector<64x16xbf16>
    %c0_12 = arith.constant 0 : index
    %c0_13 = arith.constant 0 : index
    %36 = vector.load %arg11[%c0_12, %c0_13] : memref<64x32xbf16, #tpu.memory_space<vmem>>, vector<64x16xbf16>
    %cst_14 = arith.constant dense<0.000000e+00> : vector<64x64xf32>
    %37 = tpu.matmul %35, %36, %cst_14 {dimension_numbers = #tpu.dot_dimension_numbers<[1], [1], [0], [0], [0, 0, 1, 0], [], []>} : vector<64x16xbf16>, vector<64x16xbf16>, vector<64x64xf32> -> vector<64x64xf32>
    %cst_15 = arith.constant dense<0xFF800000> : vector<64xf32>
    %38 = vector.multi_reduction <maximumf>, %37, %cst_15 [1] : vector<64x64xf32> to vector<64xf32>
    %39 = vector.shape_cast %38 : vector<64xf32> to vector<64x1xf32>
    %40 = vector.broadcast %39 : vector<64x1xf32> to vector<64x64xf32>
    %41 = arith.subf %37, %40 : vector<64x64xf32>
    %42 = math.exp %41 : vector<64x64xf32>
    %cst_16 = arith.constant dense<0.000000e+00> : vector<64xf32>
    %43 = vector.multi_reduction <add>, %42, %cst_16 [1] : vector<64x64xf32> to vector<64xf32>
    %44 = vector.shape_cast %43 : vector<64xf32> to vector<64x1xf32>
    %45 = tpu.reciprocal %44 {approx = true} : vector<64x1xf32> -> vector<64x1xf32>
    %46 = vector.broadcast %45 : vector<64x1xf32> to vector<64x64xf32>
    %47 = arith.mulf %42, %46 : vector<64x64xf32>
    %48 = arith.truncf %47 : vector<64x64xf32> to vector<64x64xbf16>
    %c0_17 = arith.constant 0 : index
    %c0_18 = arith.constant 0 : index
    %49 = vector.load %arg12[%c0_17, %c0_18] : memref<64x32xbf16, #tpu.memory_space<vmem>>, vector<64x16xbf16>
    %cst_19 = arith.constant dense<0.000000e+00> : vector<64x16xf32>
    %50 = tpu.matmul %48, %49, %cst_19 {dimension_numbers = #tpu.dot_dimension_numbers<[1], [0], [0], [1], [0, 0, 1, 1], [], []>} : vector<64x64xbf16>, vector<64x16xbf16>, vector<64x16xf32> -> vector<64x16xf32>
    %c0_20 = arith.constant 0 : index
    %c0_21 = arith.constant 0 : index
    %51 = vector.load %arg13[%c0_20, %c0_21] : memref<64x32xf32, #tpu.memory_space<vmem>>, vector<64x16xf32>
    tpu.vector_store %arg13[%c0_20, %c0_21], %50 {strides = array<i32>} : memref<64x32xf32, #tpu.memory_space<vmem>>, vector<64x16xf32>,
    %52 = vector.extract_strided_slice %34 {offsets = [0, 16], sizes = [64, 16], strides = [1, 1]} : vector<64x32xbf16> to vector<64x16xbf16>
    %c0_22 = arith.constant 0 : index
    %c16 = arith.constant 16 : index
    %53 = vector.load %arg11[%c0_22, %c16] : memref<64x32xbf16, #tpu.memory_space<vmem>>, vector<64x16xbf16>
    %cst_23 = arith.constant dense<0.000000e+00> : vector<64x64xf32>
    %54 = tpu.matmul %52, %53, %cst_23 {dimension_numbers = #tpu.dot_dimension_numbers<[1], [1], [0], [0], [0, 0, 1, 0], [], []>} : vector<64x16xbf16>, vector<64x16xbf16>, vector<64x64xf32> -> vector<64x64xf32>
    %cst_24 = arith.constant dense<0xFF800000> : vector<64xf32>
    %55 = vector.multi_reduction <maximumf>, %54, %cst_24 [1] : vector<64x64xf32> to vector<64xf32>
    %56 = vector.shape_cast %55 : vector<64xf32> to vector<64x1xf32>
    %57 = vector.broadcast %56 : vector<64x1xf32> to vector<64x64xf32>
    %58 = arith.subf %54, %57 : vector<64x64xf32>
    %59 = math.exp %58 : vector<64x64xf32>
    %cst_25 = arith.constant dense<0.000000e+00> : vector<64xf32>
    %60 = vector.multi_reduction <add>, %59, %cst_25 [1] : vector<64x64xf32> to vector<64xf32>
    %61 = vector.shape_cast %60 : vector<64xf32> to vector<64x1xf32>
    %62 = tpu.reciprocal %61 {approx = true} : vector<64x1xf32> -> vector<64x1xf32>
    %63 = vector.broadcast %62 : vector<64x1xf32> to vector<64x64xf32>
    %64 = arith.mulf %59, %63 : vector<64x64xf32>
    %65 = arith.truncf %64 : vector<64x64xf32> to vector<64x64xbf16>
    %c0_26 = arith.constant 0 : index
    %c16_27 = arith.constant 16 : index
    %66 = vector.load %arg12[%c0_26, %c16_27] : memref<64x32xbf16, #tpu.memory_space<vmem>>, vector<64x16xbf16>
    %cst_28 = arith.constant dense<0.000000e+00> : vector<64x16xf32>
    %67 = tpu.matmul %65, %66, %cst_28 {dimension_numbers = #tpu.dot_dimension_numbers<[1], [0], [0], [1], [0, 0, 1, 1], [], []>} : vector<64x64xbf16>, vector<64x16xbf16>, vector<64x16xf32> -> vector<64x16xf32>
    %c0_29 = arith.constant 0 : index
    %c16_30 = arith.constant 16 : index
    %68 = vector.load %arg13[%c0_29, %c16_30] : memref<64x32xf32, #tpu.memory_space<vmem>>, vector<64x16xf32>
    tpu.vector_store %arg13[%c0_29, %c16_30], %67 {strides = array<i32>} : memref<64x32xf32, #tpu.memory_space<vmem>>, vector<64x16xf32>,
    %c0_31 = arith.constant 0 : index
    %c0_32 = arith.constant 0 : index
    %69 = vector.load %arg13[%c0_31, %c0_32] : memref<64x32xf32, #tpu.memory_space<vmem>>, vector<64x32xf32>
    %70 = arith.truncf %69 : vector<64x32xf32> to vector<64x32xbf16>
    %c0_33 = arith.constant 0 : index
    %c0_34 = arith.constant 0 : index
    %71 = vector.load %arg8[%c0_33, %c0_34] : memref<32x32xbf16, #tpu.memory_space<vmem>>, vector<32x32xbf16>
    %cst_35 = arith.constant dense<0.000000e+00> : vector<64x32xf32>
    %72 = tpu.matmul %70, %71, %cst_35 {dimension_numbers = #tpu.dot_dimension_numbers<[1], [0], [0], [1], [0, 0, 1, 1], [], []>} : vector<64x32xbf16>, vector<32x32xbf16>, vector<64x32xf32> -> vector<64x32xf32>
    %c0_36 = arith.constant 0 : index
    %c0_37 = arith.constant 0 : index
    %73 = vector.load %arg9[%c0_36, %c0_37] : memref<1x32xf32, #tpu.memory_space<vmem>>, vector<1x32xf32>
    %74 = vector.broadcast %73 : vector<1x32xf32> to vector<64x32xf32>
    %75 = arith.addf %72, %74 : vector<64x32xf32>
    %76 = arith.addf %75, %8 : vector<64x32xf32>
    %c0_38 = arith.constant 0 : index
    %c0_39 = arith.constant 0 : index
    %c0_40 = arith.constant 0 : index
    %77 = vector.load %arg10[%c0_38, %c0_39, %c0_40] : memref<1x64x32xf32, #tpu.memory_space<vmem>>, vector<1x64x32xf32>
    %78 = vector.shape_cast %77 : vector<1x64x32xf32> to vector<64x32xf32>
    %79 = vector.shape_cast %76 : vector<64x32xf32> to vector<1x64x32xf32>
    tpu.vector_store %arg10[%c0_38, %c0_39, %c0_40], %79 {strides = array<i32>} : memref<1x64x32xf32, #tpu.memory_space<vmem>>, vector<1x64x32xf32>,
    return
  }
  func.func @transform_0(%arg0: i32, %arg1: i32) -> (i32, i32, i32) {
    %c0_i32 = arith.constant 0 : i32
    %c0_i32_0 = arith.constant 0 : i32
    %c0_i32_1 = arith.constant 0 : i32
    return %arg0, %c0_i32, %c0_i32_0 : i32, i32, i32
  }
  func.func @transform_1(%arg0: i32, %arg1: i32) -> (i32, i32) {
    %c0_i32 = arith.constant 0 : i32
    %c0_i32_0 = arith.constant 0 : i32
    %c0_i32_1 = arith.constant 0 : i32
    return %c0_i32, %c0_i32_0 : i32, i32
  }
  func.func @transform_2(%arg0: i32, %arg1: i32) -> (i32, i32) {
    %c0_i32 = arith.constant 0 : i32
    %c0_i32_0 = arith.constant 0 : i32
    %c0_i32_1 = arith.constant 0 : i32
    return %c0_i32, %c0_i32_0 : i32, i32
  }
  func.func @transform_3(%arg0: i32, %arg1: i32) -> (i32, i32) {
    %c0_i32 = arith.constant 0 : i32
    %c0_i32_0 = arith.constant 0 : i32
    %c0_i32_1 = arith.constant 0 : i32
    return %c0_i32, %c0_i32_0 : i32, i32
  }
  func.func @transform_4(%arg0: i32, %arg1: i32) -> (i32, i32) {
    %c0_i32 = arith.constant 0 : i32
    %c0_i32_0 = arith.constant 0 : i32
    %c0_i32_1 = arith.constant 0 : i32
    return %c0_i32, %c0_i32_0 : i32, i32
  }
  func.func @transform_5(%arg0: i32, %arg1: i32) -> (i32, i32) {
    %c0_i32 = arith.constant 0 : i32
    %c0_i32_0 = arith.constant 0 : i32
    %c0_i32_1 = arith.constant 0 : i32
    return %c0_i32, %c0_i32_0 : i32, i32
  }
  func.func @transform_6(%arg0: i32, %arg1: i32) -> (i32, i32) {
    %c0_i32 = arith.constant 0 : i32
    %c0_i32_0 = arith.constant 0 : i32
    %c0_i32_1 = arith.constant 0 : i32
    return %c0_i32, %c0_i32_0 : i32, i32
  }
  func.func @transform_7(%arg0: i32, %arg1: i32) -> (i32, i32) {
    %c0_i32 = arith.constant 0 : i32
    %c0_i32_0 = arith.constant 0 : i32
    %c0_i32_1 = arith.constant 0 : i32
    return %c0_i32, %c0_i32_0 : i32, i32
  }
  func.func @transform_8(%arg0: i32, %arg1: i32) -> (i32, i32, i32) {
    %c0_i32 = arith.constant 0 : i32
    %c0_i32_0 = arith.constant 0 : i32
    return %arg0, %arg1, %c0_i32 : i32, i32, i32
  }
}

</mosaic_0001>

<llo_original>
// kernel: tpu_custom_call.1
$region0: #{tpu_custom_call.1}
  #allocation0 [shape = 'u32[]', space=smem, size = 0x4, offset = 0x4, fixed_abs, tag = 'smem constant byte address 0x4 - core index']
  #allocation1 [shape = 'u32[144,128]{1,0:T(1,128)}', space=vmem, size = 0x12000, scoped, tag = 'internal scratch']
  #allocation2 [shape = 'bf16[64,32]{1,0:T(8,128)(2,1)}', space=vmem, size = 0x4000, scoped, tag = 'scratch operand']
  #allocation3 [shape = 'bf16[64,32]{1,0:T(8,128)(2,1)}', space=vmem, size = 0x4000, scoped, tag = 'scratch operand']
  #allocation4 [shape = 'f32[64,32]{1,0:T(8,128)}', space=vmem, size = 0x8000, scoped, tag = 'scratch operand']
  #allocation5 [shape = 'f32[64,32]{1,0:T(8,128)}', space=vmem, size = 0x8000, scoped, tag = 'scratch operand']
  %s0 = inlined_call_operand.hbm [shape: f32[2,32,64], index: 0, kind: input, shape index: {}]
  %s1 = inlined_call_operand.vmem [shape: f32[1,32], index: 1, kind: input, shape index: {}]
  %s2 = inlined_call_operand.vmem [shape: f32[1,32], index: 2, kind: input, shape index: {}]
  %s3 = inlined_call_operand.hbm [shape: bf16[32,32], index: 3, kind: input, shape index: {}]
  %s4 = inlined_call_operand.hbm [shape: bf16[32,32], index: 4, kind: input, shape index: {}]
  %s5 = inlined_call_operand.hbm [shape: bf16[32,32], index: 5, kind: input, shape index: {}]
  %s6 = inlined_call_operand.hbm [shape: bf16[32,32], index: 6, kind: input, shape index: {}]
  %s7 = inlined_call_operand.vmem [shape: f32[1,32], index: 7, kind: input, shape index: {}]
  %s8 = inlined_call_operand.vmem [shape: f32[2,64,32], index: 8, kind: output, shape index: {}]
  %s9 = sld [smem:[#allocation0]]
  $region89: #{tpu_custom_call.1} parent=0
    _
  %s11 = ssub.s32 1, %s9
  %s12 = scalar_select 0, %s11, %s9
  $region1: #{tpu_custom_call.1} parent=0
    #allocation6 [shape = 'u8[32768]{0}', space=vmem, size = 0x8000, scoped, tag = 'input window, operand 0']
    #allocation7 [shape = 's32[2]{0}', space=sflag, size = 0x8, scoped, tag = 'scoped memory for tpu_custom_call.1']
    #allocation8 [shape = 'u8[8192]{0}', space=vmem, size = 0x2000, scoped, tag = 'input window, operand 3, single buffered']
    #allocation9 [shape = 's32[1]{0}', space=sflag, size = 0x4, scoped, tag = 'scoped memory for tpu_custom_call.1']
    #allocation10 [shape = 'u8[8192]{0}', space=vmem, size = 0x2000, scoped, tag = 'input window, operand 4, single buffered']
    #allocation11 [shape = 'u8[8192]{0}', space=vmem, size = 0x2000, scoped, tag = 'input window, operand 5, single buffered']
    #allocation12 [shape = 's32[1]{0}', space=sflag, size = 0x4, scoped, tag = 'scoped memory for tpu_custom_call.1']
    #allocation13 [shape = 'u8[8192]{0}', space=vmem, size = 0x2000, scoped, tag = 'input window, operand 6, single buffered']
    %13 = vsyncpa [#allocation7], 0
    %s14 = scalar_lea.sflag [#allocation7], 1
    %15 = vsyncpa %s14, 0
    %16 = vsyncpa [#allocation9], 0
    %17 = vsyncpa [#allocation12], 0
    loop: start=0, step=1, limit=4
    $region2: #{tpu_custom_call.1} parent=1 // loop_pre_header
      _
    $region3: #{tpu_custom_call.1} parent=1 // loop_header
      %s19 = sphi 0, %s23
      %p20 = scmp.ge.s32.totalorder %s19, 4
      %s26 = sphi 0, %s38
      %s27 = sphi 0, %s34
      %s28 = sphi 0, %s26
      %s29 = sphi 0, %s27
      %s30 = sphi 0, %s28
      %s31 = sphi 0, %s29
      %s41 = sphi 0, %s43
      %s44 = sphi 0, %s41
      %s45 = sphi 0, %s44
      %s61 = sphi 0, %s45
      %s65 = sphi 0, %s65
      %s67 = sphi 0, %s65
      %s68 = sphi 0, %s67
      %s82 = sphi 0, %s68
      %s86 = sphi 0, %s86
      %s88 = sphi 0, %s86
      %s89 = sphi 0, %s88
      %s103 = sphi 0, %s89
      %s107 = sphi 0, %s107
      %s109 = sphi 0, %s107
      %s110 = sphi 0, %s109
      %s124 = sphi 0, %s110
      %s128 = sphi 0, %s128
      %s130 = sphi 0, %s128
      %s131 = sphi 0, %s130
      %s145 = sphi 0, %s131
      %s149 = sphi 0, %s149
      %s151 = sphi 0, %s149
      %s152 = sphi 0, %s151
      %s166 = sphi 0, %s152
      %s170 = sphi 0, %s170
      %s172 = sphi 0, %s170
      %s173 = sphi 0, %s172
      %s187 = sphi 0, %s173
      %s191 = sphi 0, %s191
      %s193 = sphi 0, %s191
      %s194 = sphi 0, %s193
      %s208 = sphi 0, %s194
      %s216 = sphi 0, %s218
      %s219 = sphi 0, %s216
      %s220 = sphi 0, %s219
      %s236 = sphi 0, %s220
    $region4: #{tpu_custom_call.1} parent=1 // loop_header_branch
      %22 = sbr.rel (%p20) target = $region8
    $region5: #{tpu_custom_call.1} parent=1 // loop_body
      %s24 = ssub.s32 %s19, 1
      %s25 = ssub.s32 %s19, 2
      %s32 = sadd.s32 1, %s27
      %p33 = scmp.ge.s32.totalorder %s32, 1
      %s34 = scalar_select %p33, 0, %s32
      %s35 = sadd.s32 1, %s26
      %s36 = scalar_select %p33, %s35, %s26
      %p37 = scmp.ge.s32.totalorder %s36, 2
      %s38 = scalar_select %p37, 0, %s36
      %s39 = ssub.s32 %s26, %s38
      %p40 = scmp.eq.s32.totalorder %s39, 0
      %s42 = sadd.s32 %s41, 1
      %s43 = scalar_select %p40, %s41, %s42
      %p46 = pneg %p40
      %p47 = scmp.eq.s32.totalorder %s19, 1
      %p48 = por %p46, %p47
      %p49 = scmp.ne.s32.totalorder %s41, %s44
      %p50 = scmp.eq.s32.totalorder %s19, 0
      %p51 = por %p49, %p50
      %p52 = scmp.ne.s32.totalorder %s41, %s44
      %p53 = scmp.eq.s32.totalorder %s24, 1
      %p54 = por %p52, %p53
      %p55 = scmp.ne.s32.totalorder %s44, %s45
      %p56 = scmp.eq.s32.totalorder %s24, 0
      %p57 = por %p55, %p56
      %p58 = scmp.ne.s32.totalorder %s44, %s45
      %p59 = scmp.eq.s32.totalorder %s25, 1
      %p60 = por %p58, %p59
      %p62 = scmp.ne.s32.totalorder %s45, %s61
      %p63 = scmp.eq.s32.totalorder %s25, 0
      %p64 = por %p62, %p63
      %s66 = sadd.s32 %s65, 1
      %p69 = scmp.eq.s32.totalorder %s19, 1
      %p70 = scmp.ne.s32.totalorder %s65, %s67
      %p71 = scmp.eq.s32.totalorder %s19, 0
      %p72 = por %p70, %p71
      %p73 = scmp.ne.s32.totalorder %s65, %s67
      %p74 = scmp.eq.s32.totalorder %s24, 1
      %p75 = por %p73, %p74
      %p76 = scmp.ne.s32.totalorder %s67, %s68
      %p77 = scmp.eq.s32.totalorder %s24, 0
      %p78 = por %p76, %p77
      %p79 = scmp.ne.s32.totalorder %s67, %s68
      %p80 = scmp.eq.s32.totalorder %s25, 1
      %p81 = por %p79, %p80
      %p83 = scmp.ne.s32.totalorder %s68, %s82
      %p84 = scmp.eq.s32.totalorder %s25, 0
      %p85 = por %p83, %p84
      %s87 = sadd.s32 %s86, 1
      %p90 = scmp.eq.s32.totalorder %s19, 1
      %p91 = scmp.ne.s32.totalorder %s86, %s88
      %p92 = scmp.eq.s32.totalorder %s19, 0
      %p93 = por %p91, %p92
      %p94 = scmp.ne.s32.totalorder %s86, %s88
      %p95 = scmp.eq.s32.totalorder %s24, 1
      %p96 = por %p94, %p95
      %p97 = scmp.ne.s32.totalorder %s88, %s89
      %p98 = scmp.eq.s32.totalorder %s24, 0
      %p99 = por %p97, %p98
      %p100 = scmp.ne.s32.totalorder %s88, %s89
      %p101 = scmp.eq.s32.totalorder %s25, 1
      %p102 = por %p100, %p101
      %p104 = scmp.ne.s32.totalorder %s89, %s103
      %p105 = scmp.eq.s32.totalorder %s25, 0
      %p106 = por %p104, %p105
      %s108 = sadd.s32 %s107, 1
      %p111 = scmp.eq.s32.totalorder %s19, 1
      %p112 = scmp.ne.s32.totalorder %s107, %s109
      %p113 = scmp.eq.s32.totalorder %s19, 0
      %p114 = por %p112, %p113
      %p115 = scmp.ne.s32.totalorder %s107, %s109
      %p116 = scmp.eq.s32.totalorder %s24, 1
      %p117 = por %p115, %p116
      %p118 = scmp.ne.s32.totalorder %s109, %s110
      %p119 = scmp.eq.s32.totalorder %s24, 0
      %p120 = por %p118, %p119
      %p121 = scmp.ne.s32.totalorder %s109, %s110
      %p122 = scmp.eq.s32.totalorder %s25, 1
      %p123 = por %p121, %p122
      %p125 = scmp.ne.s32.totalorder %s110, %s124
      %p126 = scmp.eq.s32.totalorder %s25, 0
      %p127 = por %p125, %p126
      %s129 = sadd.s32 %s128, 1
      %p132 = scmp.eq.s32.totalorder %s19, 1
      %p133 = scmp.ne.s32.totalorder %s128, %s130
      %p134 = scmp.eq.s32.totalorder %s19, 0
      %p135 = por %p133, %p134
      %p136 = scmp.ne.s32.totalorder %s128, %s130
      %p137 = scmp.eq.s32.totalorder %s24, 1
      %p138 = por %p136, %p137
      %p139 = scmp.ne.s32.totalorder %s130, %s131
      %p140 = scmp.eq.s32.totalorder %s24, 0
      %p141 = por %p139, %p140
      %p142 = scmp.ne.s32.totalorder %s130, %s131
      %p143 = scmp.eq.s32.totalorder %s25, 1
      %p144 = por %p142, %p143
      %p146 = scmp.ne.s32.totalorder %s131, %s145
      %p147 = scmp.eq.s32.totalorder %s25, 0
      %p148 = por %p146, %p147
      %s150 = sadd.s32 %s149, 1
      %p153 = scmp.eq.s32.totalorder %s19, 1
      %p154 = scmp.ne.s32.totalorder %s149, %s151
      %p155 = scmp.eq.s32.totalorder %s19, 0
      %p156 = por %p154, %p155
      %p157 = scmp.ne.s32.totalorder %s149, %s151
      %p158 = scmp.eq.s32.totalorder %s24, 1
      %p159 = por %p157, %p158
      %p160 = scmp.ne.s32.totalorder %s151, %s152
      %p161 = scmp.eq.s32.totalorder %s24, 0
      %p162 = por %p160, %p161
      %p163 = scmp.ne.s32.totalorder %s151, %s152
      %p164 = scmp.eq.s32.totalorder %s25, 1
      %p165 = por %p163, %p164
      %p167 = scmp.ne.s32.totalorder %s152, %s166
      %p168 = scmp.eq.s32.totalorder %s25, 0
      %p169 = por %p167, %p168
      %s171 = sadd.s32 %s170, 1
      %p174 = scmp.eq.s32.totalorder %s19, 1
      %p175 = scmp.ne.s32.totalorder %s170, %s172
      %p176 = scmp.eq.s32.totalorder %s19, 0
      %p177 = por %p175, %p176
      %p178 = scmp.ne.s32.totalorder %s170, %s172
      %p179 = scmp.eq.s32.totalorder %s24, 1
      %p180 = por %p178, %p179
      %p181 = scmp.ne.s32.totalorder %s172, %s173
      %p182 = scmp.eq.s32.totalorder %s24, 0
      %p183 = por %p181, %p182
      %p184 = scmp.ne.s32.totalorder %s172, %s173
      %p185 = scmp.eq.s32.totalorder %s25, 1
      %p186 = por %p184, %p185
      %p188 = scmp.ne.s32.totalorder %s173, %s187
      %p189 = scmp.eq.s32.totalorder %s25, 0
      %p190 = por %p188, %p189
      %s192 = sadd.s32 %s191, 1
      %p195 = scmp.eq.s32.totalorder %s19, 1
      %p196 = scmp.ne.s32.totalorder %s191, %s193
      %p197 = scmp.eq.s32.totalorder %s19, 0
      %p198 = por %p196, %p197
      %p199 = scmp.ne.s32.totalorder %s191, %s193
      %p200 = scmp.eq.s32.totalorder %s24, 1
      %p201 = por %p199, %p200
      %p202 = scmp.ne.s32.totalorder %s193, %s194
      %p203 = scmp.eq.s32.totalorder %s24, 0
      %p204 = por %p202, %p203
      %p205 = scmp.ne.s32.totalorder %s193, %s194
      %p206 = scmp.eq.s32.totalorder %s25, 1
      %p207 = por %p205, %p206
      %p209 = scmp.ne.s32.totalorder %s194, %s208
      %p210 = scmp.eq.s32.totalorder %s25, 0
      %p211 = por %p209, %p210
      %s212 = ssub.s32 %s26, %s38
      %s213 = ssub.s32 %s27, %s34
      %s214 = sor.u32 %s212, %s213
      %p215 = scmp.eq.s32.totalorder %s214, 0
      %s217 = sadd.s32 %s216, 1
      %s218 = scalar_select %p215, %s216, %s217
      %p221 = pneg %p215
      %p222 = scmp.eq.s32.totalorder %s19, 1
      %p223 = por %p221, %p222
      %p224 = scmp.ne.s32.totalorder %s216, %s219
      %p225 = scmp.eq.s32.totalorder %s19, 0
      %p226 = por %p224, %p225
      %p227 = scmp.ne.s32.totalorder %s216, %s219
      %p228 = scmp.eq.s32.totalorder %s24, 1
      %p229 = por %p227, %p228
      %p230 = scmp.ne.s32.totalorder %s219, %s220
      %p231 = scmp.eq.s32.totalorder %s24, 0
      %p232 = por %p230, %p231
      %p233 = scmp.ne.s32.totalorder %s219, %s220
      %p234 = scmp.eq.s32.totalorder %s25, 1
      %p235 = por %p233, %p234
      %p237 = scmp.ne.s32.totalorder %s220, %s236
      %p238 = scmp.eq.s32.totalorder %s25, 0
      %p239 = por %p237, %p238
      %p240 = scmp.le.s32.totalorder 1, %s19
      %p241 = scmp.lt.s32.totalorder %s19, 3
      %p242 = pnand %p240, %p241
      %p243 = pneg %p242
      // Predicated region
      $region9: #{tpu_custom_call.1} parent=5 // pred_check
        _
      $region10: #{tpu_custom_call.1} parent=5 // pred_check_branch
        %245 = sbr.rel (%p242) target = $region12
      $region11: #{tpu_custom_call.1} parent=5 // pred_region
        %s246 = ssub.s32 %s19, 1
        // Predicated region
        $region13: #{tpu_custom_call.1} parent=11 // pred_check
          %p247 = pneg %p78
        $region14: #{tpu_custom_call.1} parent=11 // pred_check_branch
          %249 = sbr.rel (%p247) target = $region16
        $region15: #{tpu_custom_call.1} parent=11 // pred_region
          _
        $region16: #{tpu_custom_call.1} parent=11 // pred_fallthru
          _
        // Predicated region
        $region17: #{tpu_custom_call.1} parent=11 // pred_check
          %p250 = pneg %p99
        $region18: #{tpu_custom_call.1} parent=11 // pred_check_branch
          %252 = sbr.rel (%p250) target = $region20
        $region19: #{tpu_custom_call.1} parent=11 // pred_region
          _
        $region20: #{tpu_custom_call.1} parent=11 // pred_fallthru
          _
        // Predicated region
        $region21: #{tpu_custom_call.1} parent=11 // pred_check
          %p253 = pneg %p120
        $region22: #{tpu_custom_call.1} parent=11 // pred_check_branch
          %255 = sbr.rel (%p253) target = $region24
        $region23: #{tpu_custom_call.1} parent=11 // pred_region
          %s257 = ssub.s32 256, 256
          %258 = vsyncadd [#allocation9], %s257
          %s259 = sshll.u32 [#allocation8], 4
          %s260 = int_to_ptr.vmem [resolvable:$true] %s259
          %265 = dma.hbm_to_vmem [thread:$0]  %s3, 256, %s260, [#allocation9], 64, 64, 4
        $region24: #{tpu_custom_call.1} parent=11 // pred_fallthru
          _
        // Predicated region
        $region25: #{tpu_custom_call.1} parent=11 // pred_check
          %p266 = pneg %p141
        $region26: #{tpu_custom_call.1} parent=11 // pred_check_branch
          %268 = sbr.rel (%p266) target = $region28
        $region27: #{tpu_custom_call.1} parent=11 // pred_region
          %s270 = ssub.s32 256, 256
          %271 = vsyncadd [#allocation9], %s270
          %s272 = sshll.u32 [#allocation10], 4
          %s273 = int_to_ptr.vmem [resolvable:$true] %s272
          %278 = dma.hbm_to_vmem [thread:$0]  %s4, 256, %s273, [#allocation9], 64, 64, 4
        $region28: #{tpu_custom_call.1} parent=11 // pred_fallthru
          _
        // Predicated region
        $region29: #{tpu_custom_call.1} parent=11 // pred_check
          %p279 = pneg %p162
        $region30: #{tpu_custom_call.1} parent=11 // pred_check_branch
          %281 = sbr.rel (%p279) target = $region32
        $region31: #{tpu_custom_call.1} parent=11 // pred_region
          %s283 = ssub.s32 256, 256
          %284 = vsyncadd [#allocation12], %s283
          %s285 = sshll.u32 [#allocation11], 4
          %s286 = int_to_ptr.vmem [resolvable:$true] %s285
          %291 = dma.hbm_to_vmem [thread:$0]  %s5, 256, %s286, [#allocation12], 64, 64, 4
        $region32: #{tpu_custom_call.1} parent=11 // pred_fallthru
          _
        // Predicated region
        $region33: #{tpu_custom_call.1} parent=11 // pred_check
          %p292 = pneg %p183
        $region34: #{tpu_custom_call.1} parent=11 // pred_check_branch
          %294 = sbr.rel (%p292) target = $region36
        $region35: #{tpu_custom_call.1} parent=11 // pred_region
          %s296 = ssub.s32 256, 256
          %297 = vsyncadd [#allocation12], %s296
          %s298 = sshll.u32 [#allocation13], 4
          %s299 = int_to_ptr.vmem [resolvable:$true] %s298
          %304 = dma.hbm_to_vmem [thread:$0]  %s6, 256, %s299, [#allocation12], 64, 64, 4
        $region36: #{tpu_custom_call.1} parent=11 // pred_fallthru
          _
        // Predicated region
        $region37: #{tpu_custom_call.1} parent=11 // pred_check
          %p305 = pneg %p204
        $region38: #{tpu_custom_call.1} parent=11 // pred_check_branch
          %307 = sbr.rel (%p305) target = $region40
        $region39: #{tpu_custom_call.1} parent=11 // pred_region
          _
        $region40: #{tpu_custom_call.1} parent=11 // pred_fallthru
          _
      $region12: #{tpu_custom_call.1} parent=5 // pred_fallthru
        _
      %p308 = scmp.lt.s32.totalorder %s19, 2
      // Predicated region
      $region41: #{tpu_custom_call.1} parent=5 // pred_check
        %p309 = pneg %p308
      $region42: #{tpu_custom_call.1} parent=5 // pred_check_branch
        %311 = sbr.rel (%p309) target = $region44
      $region43: #{tpu_custom_call.1} parent=5 // pred_region
        // Predicated region
        $region45: #{tpu_custom_call.1} parent=43 // pred_check
          %p312 = pneg %p51
        $region46: #{tpu_custom_call.1} parent=43 // pred_check_branch
          %314 = sbr.rel (%p312) target = $region48
        $region47: #{tpu_custom_call.1} parent=43 // pred_region
          %s315 = sand.u32 %s41, 1
          %s316 = scalar_lea.sflag [#allocation7], %s315
          %s317 = sand.u32 %s41, 1
          %s318 = smul.addr %s317, 32
          %s319 = scalar_lea.vmem [#allocation6], %s318
          %s321 = ssub.s32 512, 512
          %322 = vsyncadd %s316, %s321
          %s323 = smul.addr %s26, 4
          %s324 = smul.addr %s323, 128
          %s325 = scalar_lea.hbm %s0, %s324
          %s326 = sshll.u32 %s319, 4
          %s327 = int_to_ptr.vmem [resolvable:$true] %s326
          %332 = dma.hbm_to_vmem [thread:$0]  %s325, 512, %s327, %s316, 128, 128, 8
        $region48: #{tpu_custom_call.1} parent=43 // pred_fallthru
          _
      $region44: #{tpu_custom_call.1} parent=5 // pred_fallthru
        _
      %p333 = scmp.le.s32.totalorder 1, %s19
      %p334 = scmp.lt.s32.totalorder %s19, 3
      %p335 = pnand %p333, %p334
      %p336 = pneg %p335
      // Predicated region
      $region49: #{tpu_custom_call.1} parent=5 // pred_check
        _
      $region50: #{tpu_custom_call.1} parent=5 // pred_check_branch
        %338 = sbr.rel (%p335) target = $region52
      $region51: #{tpu_custom_call.1} parent=5 // pred_region
        %s339 = ssub.s32 %s19, 1
        %s340 = sand.u32 %s44, 1
        %s341 = scalar_lea.sflag [#allocation7], %s340
        %s342 = sand.u32 %s44, 1
        %s343 = smul.addr %s342, 32
        %s344 = scalar_lea.vmem [#allocation6], %s343
        // Predicated region
        $region53: #{tpu_custom_call.1} parent=51 // pred_check
          %p345 = pneg %p57
        $region54: #{tpu_custom_call.1} parent=51 // pred_check_branch
          %347 = sbr.rel (%p345) target = $region56
        $region55: #{tpu_custom_call.1} parent=51 // pred_region
          %348 = dma.done %s341, 512
        $region56: #{tpu_custom_call.1} parent=51 // pred_fallthru
          _
        // Predicated region
        $region57: #{tpu_custom_call.1} parent=51 // pred_check
          %p349 = pneg %p120
        $region58: #{tpu_custom_call.1} parent=51 // pred_check_branch
          %351 = sbr.rel (%p349) target = $region60
        $region59: #{tpu_custom_call.1} parent=51 // pred_region
          %352 = dma.done [#allocation9], 256
        $region60: #{tpu_custom_call.1} parent=51 // pred_fallthru
          _
        // Predicated region
        $region61: #{tpu_custom_call.1} parent=51 // pred_check
          %p353 = pneg %p141
        $region62: #{tpu_custom_call.1} parent=51 // pred_check_branch
          %355 = sbr.rel (%p353) target = $region64
        $region63: #{tpu_custom_call.1} parent=51 // pred_region
          %356 = dma.done [#allocation9], 256
        $region64: #{tpu_custom_call.1} parent=51 // pred_fallthru
          _
        // Predicated region
        $region65: #{tpu_custom_call.1} parent=51 // pred_check
          %p357 = pneg %p162
        $region66: #{tpu_custom_call.1} parent=51 // pred_check_branch
          %359 = sbr.rel (%p357) target = $region68
        $region67: #{tpu_custom_call.1} parent=51 // pred_region
          %360 = dma.done [#allocation12], 256
        $region68: #{tpu_custom_call.1} parent=51 // pred_fallthru
          _
        // Predicated region
        $region69: #{tpu_custom_call.1} parent=51 // pred_check
          %p361 = pneg %p183
        $region70: #{tpu_custom_call.1} parent=51 // pred_check_branch
          %363 = sbr.rel (%p361) target = $region72
        $region71: #{tpu_custom_call.1} parent=51 // pred_region
          %364 = dma.done [#allocation12], 256
        $region72: #{tpu_custom_call.1} parent=51 // pred_fallthru
          _
        %s365 = sand.u32 %s44, 1
        %s366 = scalar_lea.sflag [#allocation7], %s365
        %s367 = sand.u32 %s44, 1
        %s368 = smul.addr %s367, 32
        %s369 = scalar_lea.vmem [#allocation6], %s368
        %p370 = pneg %p57
        %p371 = pneg %p54
        %p372 = pneg %p78
        %p373 = pneg %p75
        %p374 = pneg %p99
        %p375 = pneg %p96
        %p376 = pneg %p120
        %p377 = pneg %p117
        %p378 = pneg %p141
        %p379 = pneg %p138
        %p380 = pneg %p162
        %p381 = pneg %p159
        %p382 = pneg %p183
        %p383 = pneg %p180
        %p384 = pneg %p204
        %p385 = pneg %p201
        %p386 = pneg %p232
        %p387 = pneg %p229
        %s388 = smul.u32 8, %s29
        %p389 = scmp.lt.s32.totalorder %s28, 1
        %s390 = scalar_select %p389, %s28, 1
        %p391 = scmp.lt.s32.totalorder %s388, 7
        %s392 = scalar_select %p391, %s388, 7
        %s393 = smul.addr %s390, 8
        %s394 = sadd.s32 %s392, %s393
        %s395 = smul.addr %s394, 8
        %s396 = scalar_lea.vmem %s8, %s395
        %s397 = smul.u32 8, %s29
        %p398 = scmp.lt.s32.totalorder %s28, 1
        %s399 = scalar_select %p398, %s28, 1
        %p400 = scmp.lt.s32.totalorder %s397, 7
        %s401 = scalar_select %p400, %s397, 7
        %s402 = smul.addr %s399, 8
        %s403 = sadd.s32 %s401, %s402
        %s404 = smul.addr %s403, 8
        %s405 = scalar_lea.vmem %s8, %s404
        %s406 = smul.u32 8, %s29
        %v408 = vld [vmem:[%s1] sm:$0x1]
        %v409 = vld [vmem:[%s2] sm:$0x1]
        %p410 = scmp.eq.s32.totalorder %s29, 0
        // Predicated region
        $region73: #{tpu_custom_call.1} parent=51 // pred_check
          %p411 = pneg %p410
        $region74: #{tpu_custom_call.1} parent=51 // pred_check_branch
          %413 = sbr.rel (%p411) target = $region76
        $region75: #{tpu_custom_call.1} parent=51 // pred_region
          %v414 = vld [vmem:[%s344] sm:$0xff]
          %v415 = vld [vmem:[%s344 + $0x8] sm:$0xff]
          %v416 = vld [vmem:[%s344 + $0x10] sm:$0xff]
          %v417 = vld [vmem:[%s344 + $0x18] sm:$0xff]
          %418 = vxpose.xlu0.b32.start [1/16] %v414, 128
          %419 = vxpose.xlu0.b32.cont [2/16] %v415, 128
          %420 = vxpose.xlu0.b32.cont [3/16] %v416, 128
          %421 = vxpose.xlu0.b32.cont [4/16] %v417, 128
          %422 = vxpose.xlu0.b32.cont [5/16] 0.0, 128
          %423 = vxpose.xlu0.b32.cont [6/16] 0.0, 128
          %424 = vxpose.xlu0.b32.cont [7/16] 0.0, 128
          %425 = vxpose.xlu0.b32.cont [8/16] 0.0, 128
          %426 = vxpose.xlu0.b32.cont [9/16] 0.0, 128
          %427 = vxpose.xlu0.b32.cont [10/16] 0.0, 128
          %428 = vxpose.xlu0.b32.cont [11/16] 0.0, 128
          %429 = vxpose.xlu0.b32.cont [12/16] 0.0, 128
          %430 = vxpose.xlu0.b32.cont [13/16] 0.0, 128
          %431 = vxpose.xlu0.b32.cont [14/16] 0.0, 128
          %432 = vxpose.xlu0.b32.cont [15/16] 0.0, 128
          %433 = vxpose.xlu0.b32.end [16/16] 0.0, 128
          %v434 = vpop.trf.xlu0
          %v435 = vpop.trf.xlu0
          %v436 = vpop.trf.xlu0
          %v437 = vpop.trf.xlu0
          %v438 = vpop.trf.xlu0
          %v439 = vpop.trf.xlu0
          %v440 = vpop.trf.xlu0
          %v441 = vpop.trf.xlu0
          %v442 = vpop.trf.xlu0
          %v443 = vpop.trf.xlu0
          %v444 = vpop.trf.xlu0
          %v445 = vpop.trf.xlu0
          %v446 = vpop.trf.xlu0
          %v447 = vpop.trf.xlu0
          %v448 = vpop.trf.xlu0
          %v449 = vpop.trf.xlu0
          %vm450 = vcmask 261120
          %451 = vst.msk [vmem:[#allocation5] sm:$0xff] %vm450, %v434
          %452 = vst.msk [vmem:[#allocation5 + $0x8] sm:$0xff] %vm450, %v435
          %453 = vst.msk [vmem:[#allocation5 + $0x10] sm:$0xff] %vm450, %v436
          %454 = vst.msk [vmem:[#allocation5 + $0x18] sm:$0xff] %vm450, %v437
          %455 = vst.msk [vmem:[#allocation5 + $0x20] sm:$0xff] %vm450, %v438
          %456 = vst.msk [vmem:[#allocation5 + $0x28] sm:$0xff] %vm450, %v439
          %457 = vst.msk [vmem:[#allocation5 + $0x30] sm:$0xff] %vm450, %v440
          %458 = vst.msk [vmem:[#allocation5 + $0x38] sm:$0xff] %vm450, %v441
          %v459 = vsel %vm450, %v434, 0.0
          %460 = vadd.xlane.f32.xlu0 %v459
          %v461 = vpop.xlane.xlu0 %460
          %v462 = vsel %vm450, %v435, 0.0
          %463 = vadd.xlane.f32.xlu0 %v462
          %v464 = vpop.xlane.xlu0 %463
          %v465 = vsel %vm450, %v436, 0.0
          %466 = vadd.xlane.f32.xlu0 %v465
          %v467 = vpop.xlane.xlu0 %466
          %v468 = vsel %vm450, %v437, 0.0
          %469 = vadd.xlane.f32.xlu0 %v468
          %v470 = vpop.xlane.xlu0 %469
          %v471 = vsel %vm450, %v438, 0.0
          %472 = vadd.xlane.f32.xlu0 %v471
          %v473 = vpop.xlane.xlu0 %472
          %v474 = vsel %vm450, %v439, 0.0
          %475 = vadd.xlane.f32.xlu0 %v474
          %v476 = vpop.xlane.xlu0 %475
          %v477 = vsel %vm450, %v440, 0.0
          %478 = vadd.xlane.f32.xlu0 %v477
          %v479 = vpop.xlane.xlu0 %478
          %v480 = vsel %vm450, %v441, 0.0
          %481 = vadd.xlane.f32.xlu0 %v480
          %v482 = vpop.xlane.xlu0 %481
          %v483 = vrcp.pop 32.0
          %v484 = vmul.f32 %v461, %v483
          %v485 = vmul.f32 %v464, %v483
          %v486 = vmul.f32 %v467, %v483
          %v487 = vmul.f32 %v470, %v483
          %v488 = vmul.f32 %v473, %v483
          %v489 = vmul.f32 %v476, %v483
          %v490 = vmul.f32 %v479, %v483
          %v491 = vmul.f32 %v482, %v483
          %v492 = vsub.f32 %v434, %v484
          %v493 = vsub.f32 %v435, %v485
          %v494 = vsub.f32 %v436, %v486
          %v495 = vsub.f32 %v437, %v487
          %v496 = vsub.f32 %v438, %v488
          %v497 = vsub.f32 %v439, %v489
          %v498 = vsub.f32 %v440, %v490
          %v499 = vsub.f32 %v441, %v491
          %v500 = vmul.f32 %v492, %v492
          %v501 = vmul.f32 %v493, %v493
          %v502 = vmul.f32 %v494, %v494
          %v503 = vmul.f32 %v495, %v495
          %v504 = vmul.f32 %v496, %v496
          %v505 = vmul.f32 %v497, %v497
          %v506 = vmul.f32 %v498, %v498
          %v507 = vmul.f32 %v499, %v499
          %v508 = vsel %vm450, %v500, 0.0
          %509 = vadd.xlane.f32.xlu0 %v508
          %v510 = vpop.xlane.xlu0 %509
          %v511 = vsel %vm450, %v501, 0.0
          %512 = vadd.xlane.f32.xlu0 %v511
          %v513 = vpop.xlane.xlu0 %512
          %v514 = vsel %vm450, %v502, 0.0
          %515 = vadd.xlane.f32.xlu0 %v514
          %v516 = vpop.xlane.xlu0 %515
          %v517 = vsel %vm450, %v503, 0.0
          %518 = vadd.xlane.f32.xlu0 %v517
          %v519 = vpop.xlane.xlu0 %518
          %v520 = vsel %vm450, %v504, 0.0
          %521 = vadd.xlane.f32.xlu0 %v520
          %v522 = vpop.xlane.xlu0 %521
          %v523 = vsel %vm450, %v505, 0.0
          %524 = vadd.xlane.f32.xlu0 %v523
          %v525 = vpop.xlane.xlu0 %524
          %v526 = vsel %vm450, %v506, 0.0
          %527 = vadd.xlane.f32.xlu0 %v526
          %v528 = vpop.xlane.xlu0 %527
          %v529 = vsel %vm450, %v507, 0.0
          %530 = vadd.xlane.f32.xlu0 %v529
          %v531 = vpop.xlane.xlu0 %530
          %v532 = vmul.f32 %v510, %v483
          %v533 = vmul.f32 %v513, %v483
          %v534 = vmul.f32 %v516, %v483
          %v535 = vmul.f32 %v519, %v483
          %v536 = vmul.f32 %v522, %v483
          %v537 = vmul.f32 %v525, %v483
          %v538 = vmul.f32 %v528, %v483
          %v539 = vmul.f32 %v531, %v483
          %v540 = vadd.f32 %v532, 1e-05
          %v541 = vadd.f32 %v533, 1e-05
          %v542 = vadd.f32 %v534, 1e-05
          %v543 = vadd.f32 %v535, 1e-05
          %v544 = vadd.f32 %v536, 1e-05
          %v545 = vadd.f32 %v537, 1e-05
          %v546 = vadd.f32 %v538, 1e-05
          %v547 = vadd.f32 %v539, 1e-05
          %v548 = vrsqrt.pop %v540
          %v549 = vrsqrt.pop %v541
          %v550 = vrsqrt.pop %v542
          %v551 = vrsqrt.pop %v543
          %v552 = vrsqrt.pop %v544
          %v553 = vrsqrt.pop %v545
          %v554 = vrsqrt.pop %v546
          %v555 = vrsqrt.pop %v547
          %v556 = vmul.f32 %v492, %v548
          %v557 = vmul.f32 %v493, %v549
          %v558 = vmul.f32 %v494, %v550
          %v559 = vmul.f32 %v495, %v551
          %v560 = vmul.f32 %v496, %v552
          %v561 = vmul.f32 %v497, %v553
          %v562 = vmul.f32 %v498, %v554
          %v563 = vmul.f32 %v499, %v555
          %v565 = vlaneseq
          %v566 = vshrl.u32 %v565, 7
          %v567 = vsub.s32 0, %v566
          %v568 = vrot.slane %v408, %v567
          %v570 = vmul.f32 %v556, %v568
          %v571 = vmul.f32 %v557, %v568
          %v572 = vmul.f32 %v558, %v568
          %v573 = vmul.f32 %v559, %v568
          %v574 = vmul.f32 %v560, %v568
          %v575 = vmul.f32 %v561, %v568
          %v576 = vmul.f32 %v562, %v568
          %v577 = vmul.f32 %v563, %v568
          %v579 = vlaneseq
          %v580 = vshrl.u32 %v579, 7
          %v581 = vsub.s32 0, %v580
          %v582 = vrot.slane %v409, %v581
          %v584 = vadd.f32 %v570, %v582
          %v585 = vadd.f32 %v571, %v582
          %v586 = vadd.f32 %v572, %v582
          %v587 = vadd.f32 %v573, %v582
          %v588 = vadd.f32 %v574, %v582
          %v589 = vadd.f32 %v575, %v582
          %v590 = vadd.f32 %v576, %v582
          %v591 = vadd.f32 %v577, %v582
          %v592 = vpack.c.bf16 %v585, %v584
          %v593 = vpack.c.bf16 %v587, %v586
          %v594 = vpack.c.bf16 %v589, %v588
          %v595 = vpack.c.bf16 %v591, %v590
          %v596 = vld [vmem:[#allocation10] sm:$0xf]
          %v597 = vld [vmem:[#allocation10 + $0x4] sm:$0xf]
          %v598 = vld [vmem:[#allocation10 + $0x8] sm:$0xf]
          %v599 = vld [vmem:[#allocation10 + $0xc] sm:$0xf]
          %v604 = vunpack.c.l.b16 %v596
          %v605 = vunpack.c.l.b16 %v597
          %v606 = vunpack.c.l.b16 %v598
          %v607 = vunpack.c.l.b16 %v599
          %v608 = vpack.c.b16 %v605, %v604
          %v609 = vpack.c.b16 %v607, %v606
          %v613 = vsel %vm450, %v592, 0
          %v616 = vsel %vm450, %v593, 0
          %v619 = vsel %vm450, %v594, 0
          %v622 = vsel %vm450, %v595, 0
          %624 = vmatprep.subr.bf16.mxu0 0
          %625 = vmatpush1.bf16.msra.mxu0 0
          %626 = vmatprep.subr.bf16.mxu0 0
          %627 = vmatpush1.bf16.msra.mxu0 0
          %628 = vmatprep.subr.bf16.mxu0 0
          %629 = vmatpush1.bf16.msra.mxu0 0
          %630 = vmatprep.subr.bf16.mxu0 0
          %631 = vmatpush1.bf16.msra.mxu0 0
          %632 = vmatprep.subr.bf16.mxu0 0
          %633 = vmatpush1.bf16.msra.mxu0 0
          %634 = vmatprep.subr.bf16.mxu0 0
          %635 = vmatpush1.bf16.msra.mxu0 0
          %636 = vmatprep.subr.bf16.mxu0 0
          %637 = vmatpush1.bf16.msra.mxu0 %v609
          %638 = vmatprep.subr.bf16.mxu0 0
          %639 = vmatpush1.bf16.msra.mxu0 %v608
          %640 = vmatprep.subr.bf16.mxu0 0
          %641 = vmatpush2.bf16.msra.mxu0 0
          %642 = vmatprep.subr.bf16.mxu0 0
          %643 = vmatpush2.bf16.msra.mxu0 0
          %644 = vmatprep.subr.bf16.mxu0 0
          %645 = vmatpush2.bf16.msra.mxu0 0
          %646 = vmatprep.subr.bf16.mxu0 0
          %647 = vmatpush2.bf16.msra.mxu0 0
          %648 = vmatprep.subr.bf16.mxu0 0
          %649 = vmatpush2.bf16.msra.mxu0 0
          %650 = vmatprep.subr.bf16.mxu0 0
          %651 = vmatpush2.bf16.msra.mxu0 0
          %652 = vmatprep.subr.bf16.mxu0 0
          %653 = vmatpush2.bf16.msra.mxu0 0
          %654 = vmatprep.subr.bf16.mxu0 0
          %655 = vmatpush2.bf16.msra.mxu0 0
          %656 = vmatprep.mubr.bf16.mxu0 0
          %657 = vmatmul.mubr.bf16.gmra.mxu0 %v613
          %v658 = vpop.f32.mrf.mxu0
          %v659 = vadd.f32 0.0, %v658
          %v660 = vpop.f32.mrf.mxu0
          %v661 = vpop.f32.mrf.mxu0
          %v662 = vadd.f32 0.0, %v661
          %v663 = vpop.f32.mrf.mxu0
          %664 = vmatprep.mubr.bf16.mxu0 0
          %665 = vmatmul.mubr.bf16.gmra.mxu0 %v616
          %v666 = vpop.f32.mrf.mxu0
          %v667 = vadd.f32 0.0, %v666
          %v668 = vpop.f32.mrf.mxu0
          %v669 = vpop.f32.mrf.mxu0
          %v670 = vadd.f32 0.0, %v669
          %v671 = vpop.f32.mrf.mxu0
          %672 = vmatprep.mubr.bf16.mxu0 0
          %673 = vmatmul.mubr.bf16.gmra.mxu0 %v619
          %v674 = vpop.f32.mrf.mxu0
          %v675 = vadd.f32 0.0, %v674
          %v676 = vpop.f32.mrf.mxu0
          %v677 = vpop.f32.mrf.mxu0
          %v678 = vadd.f32 0.0, %v677
          %v679 = vpop.f32.mrf.mxu0
          %680 = vmatprep.mubr.bf16.mxu0 0
          %681 = vmatmul.mubr.bf16.gmra.mxu0 %v622
          %v682 = vpop.f32.mrf.mxu0
          %v683 = vadd.f32 0.0, %v682
          %v684 = vpop.f32.mrf.mxu0
          %v685 = vpop.f32.mrf.mxu0
          %v686 = vadd.f32 0.0, %v685
          %v687 = vpop.f32.mrf.mxu0
          %688 = vdwg.mxu0
          %v689 = vpack.c.bf16 %v662, %v659
          %v690 = vpack.c.bf16 %v670, %v667
          %v691 = vpack.c.bf16 %v678, %v675
          %v692 = vpack.c.bf16 %v686, %v683
          %v697 = vunpack.c.l.b16 %v689
          %v698 = vunpack.c.h.b16 %v689
          %v699 = vunpack.c.l.b16 %v690
          %v700 = vunpack.c.h.b16 %v690
          %v701 = vunpack.c.l.b16 %v691
          %v702 = vunpack.c.h.b16 %v691
          %v703 = vunpack.c.l.b16 %v692
          %v704 = vunpack.c.h.b16 %v692
          %v705 = vpack.c.b16 %v697, %v697
          %v706 = vpack.c.b16 %v698, %v698
          %v707 = vpack.c.b16 %v699, %v699
          %v708 = vpack.c.b16 %v700, %v700
          %v709 = vpack.c.b16 %v701, %v701
          %v710 = vpack.c.b16 %v702, %v702
          %v711 = vpack.c.b16 %v703, %v703
          %v712 = vpack.c.b16 %v704, %v704
          %vm721 = vcmask 257024
          %722 = vst.msk [vmem:[#allocation2] sm:$0xf] %vm721, %v705
          %723 = vst.msk [vmem:[#allocation2 + $0x4] sm:$0xf] %vm721, %v706
          %724 = vst.msk [vmem:[#allocation2 + $0x8] sm:$0xf] %vm721, %v707
          %725 = vst.msk [vmem:[#allocation2 + $0xc] sm:$0xf] %vm721, %v708
          %726 = vst.msk [vmem:[#allocation2 + $0x10] sm:$0xf] %vm721, %v709
          %727 = vst.msk [vmem:[#allocation2 + $0x14] sm:$0xf] %vm721, %v710
          %728 = vst.msk [vmem:[#allocation2 + $0x18] sm:$0xf] %vm721, %v711
          %729 = vst.msk [vmem:[#allocation2 + $0x1c] sm:$0xf] %vm721, %v712
          %v730 = vld [vmem:[#allocation11] sm:$0xf]
          %v731 = vld [vmem:[#allocation11 + $0x4] sm:$0xf]
          %v732 = vld [vmem:[#allocation11 + $0x8] sm:$0xf]
          %v733 = vld [vmem:[#allocation11 + $0xc] sm:$0xf]
          %v738 = vunpack.c.l.b16 %v730
          %v739 = vunpack.c.l.b16 %v731
          %v740 = vunpack.c.l.b16 %v732
          %v741 = vunpack.c.l.b16 %v733
          %v742 = vpack.c.b16 %v739, %v738
          %v743 = vpack.c.b16 %v741, %v740
          %746 = vmatprep.subr.bf16.mxu0 0
          %747 = vmatpush1.bf16.msra.mxu0 0
          %748 = vmatprep.subr.bf16.mxu0 0
          %749 = vmatpush1.bf16.msra.mxu0 0
          %750 = vmatprep.subr.bf16.mxu0 0
          %751 = vmatpush1.bf16.msra.mxu0 0
          %752 = vmatprep.subr.bf16.mxu0 0
          %753 = vmatpush1.bf16.msra.mxu0 0
          %754 = vmatprep.subr.bf16.mxu0 0
          %755 = vmatpush1.bf16.msra.mxu0 0
          %756 = vmatprep.subr.bf16.mxu0 0
          %757 = vmatpush1.bf16.msra.mxu0 0
          %758 = vmatprep.subr.bf16.mxu0 0
          %759 = vmatpush1.bf16.msra.mxu0 %v743
          %760 = vmatprep.subr.bf16.mxu0 0
          %761 = vmatpush1.bf16.msra.mxu0 %v742
          %762 = vmatprep.subr.bf16.mxu0 0
          %763 = vmatpush2.bf16.msra.mxu0 0
          %764 = vmatprep.subr.bf16.mxu0 0
          %765 = vmatpush2.bf16.msra.mxu0 0
          %766 = vmatprep.subr.bf16.mxu0 0
          %767 = vmatpush2.bf16.msra.mxu0 0
          %768 = vmatprep.subr.bf16.mxu0 0
          %769 = vmatpush2.bf16.msra.mxu0 0
          %770 = vmatprep.subr.bf16.mxu0 0
          %771 = vmatpush2.bf16.msra.mxu0 0
          %772 = vmatprep.subr.bf16.mxu0 0
          %773 = vmatpush2.bf16.msra.mxu0 0
          %774 = vmatprep.subr.bf16.mxu0 0
          %775 = vmatpush2.bf16.msra.mxu0 0
          %776 = vmatprep.subr.bf16.mxu0 0
          %777 = vmatpush2.bf16.msra.mxu0 0
          %778 = vmatprep.mubr.bf16.mxu0 0
          %779 = vmatmul.mubr.bf16.gmra.mxu0 %v613
          %v780 = vpop.f32.mrf.mxu0
          %v781 = vadd.f32 0.0, %v780
          %v782 = vpop.f32.mrf.mxu0
          %v783 = vpop.f32.mrf.mxu0
          %v784 = vadd.f32 0.0, %v783
          %v785 = vpop.f32.mrf.mxu0
          %786 = vmatprep.mubr.bf16.mxu0 0
          %787 = vmatmul.mubr.bf16.gmra.mxu0 %v616
          %v788 = vpop.f32.mrf.mxu0
          %v789 = vadd.f32 0.0, %v788
          %v790 = vpop.f32.mrf.mxu0
          %v791 = vpop.f32.mrf.mxu0
          %v792 = vadd.f32 0.0, %v791
          %v793 = vpop.f32.mrf.mxu0
          %794 = vmatprep.mubr.bf16.mxu0 0
          %795 = vmatmul.mubr.bf16.gmra.mxu0 %v619
          %v796 = vpop.f32.mrf.mxu0
          %v797 = vadd.f32 0.0, %v796
          %v798 = vpop.f32.mrf.mxu0
          %v799 = vpop.f32.mrf.mxu0
          %v800 = vadd.f32 0.0, %v799
          %v801 = vpop.f32.mrf.mxu0
          %802 = vmatprep.mubr.bf16.mxu0 0
          %803 = vmatmul.mubr.bf16.gmra.mxu0 %v622
          %v804 = vpop.f32.mrf.mxu0
          %v805 = vadd.f32 0.0, %v804
          %v806 = vpop.f32.mrf.mxu0
          %v807 = vpop.f32.mrf.mxu0
          %v808 = vadd.f32 0.0, %v807
          %v809 = vpop.f32.mrf.mxu0
          %810 = vdwg.mxu0
          %v811 = vpack.c.bf16 %v784, %v781
          %v812 = vpack.c.bf16 %v792, %v789
          %v813 = vpack.c.bf16 %v800, %v797
          %v814 = vpack.c.bf16 %v808, %v805
          %v819 = vunpack.c.l.b16 %v811
          %v820 = vunpack.c.h.b16 %v811
          %v821 = vunpack.c.l.b16 %v812
          %v822 = vunpack.c.h.b16 %v812
          %v823 = vunpack.c.l.b16 %v813
          %v824 = vunpack.c.h.b16 %v813
          %v825 = vunpack.c.l.b16 %v814
          %v826 = vunpack.c.h.b16 %v814
          %v827 = vpack.c.b16 %v819, %v819
          %v828 = vpack.c.b16 %v820, %v820
          %v829 = vpack.c.b16 %v821, %v821
          %v830 = vpack.c.b16 %v822, %v822
          %v831 = vpack.c.b16 %v823, %v823
          %v832 = vpack.c.b16 %v824, %v824
          %v833 = vpack.c.b16 %v825, %v825
          %v834 = vpack.c.b16 %v826, %v826
          %843 = vst.msk [vmem:[#allocation3] sm:$0xf] %vm721, %v827
          %844 = vst.msk [vmem:[#allocation3 + $0x4] sm:$0xf] %vm721, %v828
          %845 = vst.msk [vmem:[#allocation3 + $0x8] sm:$0xf] %vm721, %v829
          %846 = vst.msk [vmem:[#allocation3 + $0xc] sm:$0xf] %vm721, %v830
          %847 = vst.msk [vmem:[#allocation3 + $0x10] sm:$0xf] %vm721, %v831
          %848 = vst.msk [vmem:[#allocation3 + $0x14] sm:$0xf] %vm721, %v832
          %849 = vst.msk [vmem:[#allocation3 + $0x18] sm:$0xf] %vm721, %v833
          %850 = vst.msk [vmem:[#allocation3 + $0x1c] sm:$0xf] %vm721, %v834
        $region76: #{tpu_custom_call.1} parent=51 // pred_fallthru
          _
        %s851 = smul.u32 %s29, 64
        %s852 = scalar_lea.vmem [#allocation5], %s851
        %v853 = vld [vmem:[%s852] sm:$0xff]
        %v854 = vld [vmem:[%s852 + $0x8] sm:$0xff]
        %v855 = vld [vmem:[%s852 + $0x10] sm:$0xff]
        %v856 = vld [vmem:[%s852 + $0x18] sm:$0xff]
        %v857 = vld [vmem:[%s852 + $0x20] sm:$0xff]
        %v858 = vld [vmem:[%s852 + $0x28] sm:$0xff]
        %v859 = vld [vmem:[%s852 + $0x30] sm:$0xff]
        %v860 = vld [vmem:[%s852 + $0x38] sm:$0xff]
        %vm861 = vcmask 261120
        %v862 = vsel %vm861, %v853, 0.0
        %863 = vadd.xlane.f32.xlu0 %v862
        %v864 = vpop.xlane.xlu0 %863
        %v865 = vsel %vm861, %v854, 0.0
        %866 = vadd.xlane.f32.xlu0 %v865
        %v867 = vpop.xlane.xlu0 %866
        %v868 = vsel %vm861, %v855, 0.0
        %869 = vadd.xlane.f32.xlu0 %v868
        %v870 = vpop.xlane.xlu0 %869
        %v871 = vsel %vm861, %v856, 0.0
        %872 = vadd.xlane.f32.xlu0 %v871
        %v873 = vpop.xlane.xlu0 %872
        %v874 = vsel %vm861, %v857, 0.0
        %875 = vadd.xlane.f32.xlu0 %v874
        %v876 = vpop.xlane.xlu0 %875
        %v877 = vsel %vm861, %v858, 0.0
        %878 = vadd.xlane.f32.xlu0 %v877
        %v879 = vpop.xlane.xlu0 %878
        %v880 = vsel %vm861, %v859, 0.0
        %881 = vadd.xlane.f32.xlu0 %v880
        %v882 = vpop.xlane.xlu0 %881
        %v883 = vsel %vm861, %v860, 0.0
        %884 = vadd.xlane.f32.xlu0 %v883
        %v885 = vpop.xlane.xlu0 %884
        %v886 = vrcp.pop 32.0
        %v887 = vmul.f32 %v864, %v886
        %v888 = vmul.f32 %v867, %v886
        %v889 = vmul.f32 %v870, %v886
        %v890 = vmul.f32 %v873, %v886
        %v891 = vmul.f32 %v876, %v886
        %v892 = vmul.f32 %v879, %v886
        %v893 = vmul.f32 %v882, %v886
        %v894 = vmul.f32 %v885, %v886
        %v895 = vsub.f32 %v853, %v887
        %v896 = vsub.f32 %v854, %v888
        %v897 = vsub.f32 %v855, %v889
        %v898 = vsub.f32 %v856, %v890
        %v899 = vsub.f32 %v857, %v891
        %v900 = vsub.f32 %v858, %v892
        %v901 = vsub.f32 %v859, %v893
        %v902 = vsub.f32 %v860, %v894
        %v903 = vmul.f32 %v895, %v895
        %v904 = vmul.f32 %v896, %v896
        %v905 = vmul.f32 %v897, %v897
        %v906 = vmul.f32 %v898, %v898
        %v907 = vmul.f32 %v899, %v899
        %v908 = vmul.f32 %v900, %v900
        %v909 = vmul.f32 %v901, %v901
        %v910 = vmul.f32 %v902, %v902
        %v911 = vsel %vm861, %v903, 0.0
        %912 = vadd.xlane.f32.xlu0 %v911
        %v913 = vpop.xlane.xlu0 %912
        %v914 = vsel %vm861, %v904, 0.0
        %915 = vadd.xlane.f32.xlu0 %v914
        %v916 = vpop.xlane.xlu0 %915
        %v917 = vsel %vm861, %v905, 0.0
        %918 = vadd.xlane.f32.xlu0 %v917
        %v919 = vpop.xlane.xlu0 %918
        %v920 = vsel %vm861, %v906, 0.0
        %921 = vadd.xlane.f32.xlu0 %v920
        %v922 = vpop.xlane.xlu0 %921
        %v923 = vsel %vm861, %v907, 0.0
        %924 = vadd.xlane.f32.xlu0 %v923
        %v925 = vpop.xlane.xlu0 %924
        %v926 = vsel %vm861, %v908, 0.0
        %927 = vadd.xlane.f32.xlu0 %v926
        %v928 = vpop.xlane.xlu0 %927
        %v929 = vsel %vm861, %v909, 0.0
        %930 = vadd.xlane.f32.xlu0 %v929
        %v931 = vpop.xlane.xlu0 %930
        %v932 = vsel %vm861, %v910, 0.0
        %933 = vadd.xlane.f32.xlu0 %v932
        %v934 = vpop.xlane.xlu0 %933
        %v935 = vmul.f32 %v913, %v886
        %v936 = vmul.f32 %v916, %v886
        %v937 = vmul.f32 %v919, %v886
        %v938 = vmul.f32 %v922, %v886
        %v939 = vmul.f32 %v925, %v886
        %v940 = vmul.f32 %v928, %v886
        %v941 = vmul.f32 %v931, %v886
        %v942 = vmul.f32 %v934, %v886
        %v943 = vadd.f32 %v935, 1e-05
        %v944 = vadd.f32 %v936, 1e-05
        %v945 = vadd.f32 %v937, 1e-05
        %v946 = vadd.f32 %v938, 1e-05
        %v947 = vadd.f32 %v939, 1e-05
        %v948 = vadd.f32 %v940, 1e-05
        %v949 = vadd.f32 %v941, 1e-05
        %v950 = vadd.f32 %v942, 1e-05
        %v951 = vrsqrt.pop %v943
        %v952 = vrsqrt.pop %v944
        %v953 = vrsqrt.pop %v945
        %v954 = vrsqrt.pop %v946
        %v955 = vrsqrt.pop %v947
        %v956 = vrsqrt.pop %v948
        %v957 = vrsqrt.pop %v949
        %v958 = vrsqrt.pop %v950
        %v959 = vmul.f32 %v895, %v951
        %v960 = vmul.f32 %v896, %v952
        %v961 = vmul.f32 %v897, %v953
        %v962 = vmul.f32 %v898, %v954
        %v963 = vmul.f32 %v899, %v955
        %v964 = vmul.f32 %v900, %v956
        %v965 = vmul.f32 %v901, %v957
        %v966 = vmul.f32 %v902, %v958
        %v968 = vlaneseq
        %v969 = vshrl.u32 %v968, 7
        %v970 = vsub.s32 0, %v969
        %v971 = vrot.slane %v408, %v970
        %v973 = vmul.f32 %v959, %v971
        %v974 = vmul.f32 %v960, %v971
        %v975 = vmul.f32 %v961, %v971
        %v976 = vmul.f32 %v962, %v971
        %v977 = vmul.f32 %v963, %v971
        %v978 = vmul.f32 %v964, %v971
        %v979 = vmul.f32 %v965, %v971
        %v980 = vmul.f32 %v966, %v971
        %v982 = vlaneseq
        %v983 = vshrl.u32 %v982, 7
        %v984 = vsub.s32 0, %v983
        %v985 = vrot.slane %v409, %v984
        %v987 = vadd.f32 %v973, %v985
        %v988 = vadd.f32 %v974, %v985
        %v989 = vadd.f32 %v975, %v985
        %v990 = vadd.f32 %v976, %v985
        %v991 = vadd.f32 %v977, %v985
        %v992 = vadd.f32 %v978, %v985
        %v993 = vadd.f32 %v979, %v985
        %v994 = vadd.f32 %v980, %v985
        %v995 = vpack.c.bf16 %v988, %v987
        %v996 = vpack.c.bf16 %v990, %v989
        %v997 = vpack.c.bf16 %v992, %v991
        %v998 = vpack.c.bf16 %v994, %v993
        %v999 = vld [vmem:[#allocation8] sm:$0xf]
        %v1000 = vld [vmem:[#allocation8 + $0x4] sm:$0xf]
        %v1001 = vld [vmem:[#allocation8 + $0x8] sm:$0xf]
        %v1002 = vld [vmem:[#allocation8 + $0xc] sm:$0xf]
        %v1007 = vunpack.c.l.b16 %v999
        %v1008 = vunpack.c.l.b16 %v1000
        %v1009 = vunpack.c.l.b16 %v1001
        %v1010 = vunpack.c.l.b16 %v1002
        %v1011 = vpack.c.b16 %v1008, %v1007
        %v1012 = vpack.c.b16 %v1010, %v1009
        %v1016 = vsel %vm861, %v995, 0
        %v1019 = vsel %vm861, %v996, 0
        %v1022 = vsel %vm861, %v997, 0
        %v1025 = vsel %vm861, %v998, 0
        %1027 = vmatprep.subr.bf16.mxu0 0
        %1028 = vmatpush1.bf16.msra.mxu0 0
        %1029 = vmatprep.subr.bf16.mxu0 0
        %1030 = vmatpush1.bf16.msra.mxu0 0
        %1031 = vmatprep.subr.bf16.mxu0 0
        %1032 = vmatpush1.bf16.msra.mxu0 0
        %1033 = vmatprep.subr.bf16.mxu0 0
        %1034 = vmatpush1.bf16.msra.mxu0 0
        %1035 = vmatprep.subr.bf16.mxu0 0
        %1036 = vmatpush1.bf16.msra.mxu0 0
        %1037 = vmatprep.subr.bf16.mxu0 0
        %1038 = vmatpush1.bf16.msra.mxu0 0
        %1039 = vmatprep.subr.bf16.mxu0 0
        %1040 = vmatpush1.bf16.msra.mxu0 %v1012
        %1041 = vmatprep.subr.bf16.mxu0 0
        %1042 = vmatpush1.bf16.msra.mxu0 %v1011
        %1043 = vmatprep.subr.bf16.mxu0 0
        %1044 = vmatpush2.bf16.msra.mxu0 0
        %1045 = vmatprep.subr.bf16.mxu0 0
        %1046 = vmatpush2.bf16.msra.mxu0 0
        %1047 = vmatprep.subr.bf16.mxu0 0
        %1048 = vmatpush2.bf16.msra.mxu0 0
        %1049 = vmatprep.subr.bf16.mxu0 0
        %1050 = vmatpush2.bf16.msra.mxu0 0
        %1051 = vmatprep.subr.bf16.mxu0 0
        %1052 = vmatpush2.bf16.msra.mxu0 0
        %1053 = vmatprep.subr.bf16.mxu0 0
        %1054 = vmatpush2.bf16.msra.mxu0 0
        %1055 = vmatprep.subr.bf16.mxu0 0
        %1056 = vmatpush2.bf16.msra.mxu0 0
        %1057 = vmatprep.subr.bf16.mxu0 0
        %1058 = vmatpush2.bf16.msra.mxu0 0
        %1059 = vmatprep.mubr.bf16.mxu0 0
        %1060 = vmatmul.mubr.bf16.gmra.mxu0 %v1016
        %v1061 = vpop.f32.mrf.mxu0
        %v1062 = vadd.f32 0.0, %v1061
        %v1063 = vpop.f32.mrf.mxu0
        %v1064 = vpop.f32.mrf.mxu0
        %v1065 = vadd.f32 0.0, %v1064
        %v1066 = vpop.f32.mrf.mxu0
        %1067 = vmatprep.mubr.bf16.mxu0 0
        %1068 = vmatmul.mubr.bf16.gmra.mxu0 %v1019
        %v1069 = vpop.f32.mrf.mxu0
        %v1070 = vadd.f32 0.0, %v1069
        %v1071 = vpop.f32.mrf.mxu0
        %v1072 = vpop.f32.mrf.mxu0
        %v1073 = vadd.f32 0.0, %v1072
        %v1074 = vpop.f32.mrf.mxu0
        %1075 = vmatprep.mubr.bf16.mxu0 0
        %1076 = vmatmul.mubr.bf16.gmra.mxu0 %v1022
        %v1077 = vpop.f32.mrf.mxu0
        %v1078 = vadd.f32 0.0, %v1077
        %v1079 = vpop.f32.mrf.mxu0
        %v1080 = vpop.f32.mrf.mxu0
        %v1081 = vadd.f32 0.0, %v1080
        %v1082 = vpop.f32.mrf.mxu0
        %1083 = vmatprep.mubr.bf16.mxu0 0
        %1084 = vmatmul.mubr.bf16.gmra.mxu0 %v1025
        %v1085 = vpop.f32.mrf.mxu0
        %v1086 = vadd.f32 0.0, %v1085
        %v1087 = vpop.f32.mrf.mxu0
        %v1088 = vpop.f32.mrf.mxu0
        %v1089 = vadd.f32 0.0, %v1088
        %v1090 = vpop.f32.mrf.mxu0
        %1091 = vdwg.mxu0
        %v1092 = vpack.c.bf16 %v1065, %v1062
        %v1093 = vpack.c.bf16 %v1073, %v1070
        %v1094 = vpack.c.bf16 %v1081, %v1078
        %v1095 = vpack.c.bf16 %v1089, %v1086
        %v1096 = vld [vmem:[#allocation2] sm:$0xf]
        %v1097 = vld [vmem:[#allocation2 + $0x4] sm:$0xf]
        %v1098 = vld [vmem:[#allocation2 + $0x8] sm:$0xf]
        %v1099 = vld [vmem:[#allocation2 + $0xc] sm:$0xf]
        %v1100 = vld [vmem:[#allocation2 + $0x10] sm:$0xf]
        %v1101 = vld [vmem:[#allocation2 + $0x14] sm:$0xf]
        %v1102 = vld [vmem:[#allocation2 + $0x18] sm:$0xf]
        %v1103 = vld [vmem:[#allocation2 + $0x1c] sm:$0xf]
        %v1112 = vunpack.c.l.b16 %v1096
        %v1113 = vunpack.c.l.b16 %v1097
        %v1114 = vunpack.c.l.b16 %v1098
        %v1115 = vunpack.c.l.b16 %v1099
        %v1116 = vunpack.c.l.b16 %v1100
        %v1117 = vunpack.c.l.b16 %v1101
        %v1118 = vunpack.c.l.b16 %v1102
        %v1119 = vunpack.c.l.b16 %v1103
        %v1120 = vpack.c.b16 %v1113, %v1112
        %v1121 = vpack.c.b16 %v1115, %v1114
        %v1122 = vpack.c.b16 %v1117, %v1116
        %v1123 = vpack.c.b16 %v1119, %v1118
        %vm1124 = vcmask 130048
        %v1126 = vsel %vm1124, %v1092, 0
        %v1129 = vsel %vm1124, %v1093, 0
        %v1132 = vsel %vm1124, %v1094, 0
        %v1135 = vsel %vm1124, %v1095, 0
        %v1138 = vsel %vm1124, %v1120, 0
        %v1141 = vsel %vm1124, %v1121, 0
        %v1144 = vsel %vm1124, %v1122, 0
        %v1147 = vsel %vm1124, %v1123, 0
        %1149 = vmatprep.subr.bf16.mxu0 0
        %1150 = vmatpush1.bf16.xpose.msra.mxu0 0
        %1151 = vmatprep.subr.bf16.mxu0 0
        %1152 = vmatpush1.bf16.xpose.msra.mxu0 0
        %1153 = vmatprep.subr.bf16.mxu0 0
        %1154 = vmatpush1.bf16.xpose.msra.mxu0 0
        %1155 = vmatprep.subr.bf16.mxu0 0
        %1156 = vmatpush1.bf16.xpose.msra.mxu0 0
        %1157 = vmatprep.subr.bf16.mxu0 0
        %1158 = vmatpush1.bf16.xpose.msra.mxu0 %v1147
        %1159 = vmatprep.subr.bf16.mxu0 0
        %1160 = vmatpush1.bf16.xpose.msra.mxu0 %v1144
        %1161 = vmatprep.subr.bf16.mxu0 0
        %1162 = vmatpush1.bf16.xpose.msra.mxu0 %v1141
        %1163 = vmatprep.subr.bf16.mxu0 0
        %1164 = vmatpush1.bf16.xpose.msra.mxu0 %v1138
        %1165 = vmatprep.subr.bf16.mxu0 0
        %1166 = vmatpush2.bf16.xpose.msra.mxu0 0
        %1167 = vmatprep.subr.bf16.mxu0 0
        %1168 = vmatpush2.bf16.xpose.msra.mxu0 0
        %1169 = vmatprep.subr.bf16.mxu0 0
        %1170 = vmatpush2.bf16.xpose.msra.mxu0 0
        %1171 = vmatprep.subr.bf16.mxu0 0
        %1172 = vmatpush2.bf16.xpose.msra.mxu0 0
        %1173 = vmatprep.subr.bf16.mxu0 0
        %1174 = vmatpush2.bf16.xpose.msra.mxu0 0
        %1175 = vmatprep.subr.bf16.mxu0 0
        %1176 = vmatpush2.bf16.xpose.msra.mxu0 0
        %1177 = vmatprep.subr.bf16.mxu0 0
        %1178 = vmatpush2.bf16.xpose.msra.mxu0 0
        %1179 = vmatprep.subr.bf16.mxu0 0
        %1180 = vmatpush2.bf16.xpose.msra.mxu0 0
        %1181 = vmatprep.mubr.bf16.mxu0 0
        %1182 = vmatmul.mubr.bf16.gmra.mxu0 %v1126
        %v1183 = vpop.f32.mrf.mxu0
        %v1184 = vadd.f32 0.0, %v1183
        %v1185 = vpop.f32.mrf.mxu0
        %v1186 = vpop.f32.mrf.mxu0
        %v1187 = vadd.f32 0.0, %v1186
        %v1188 = vpop.f32.mrf.mxu0
        %1189 = vmatprep.mubr.bf16.mxu0 0
        %1190 = vmatmul.mubr.bf16.gmra.mxu0 %v1129
        %v1191 = vpop.f32.mrf.mxu0
        %v1192 = vadd.f32 0.0, %v1191
        %v1193 = vpop.f32.mrf.mxu0
        %v1194 = vpop.f32.mrf.mxu0
        %v1195 = vadd.f32 0.0, %v1194
        %v1196 = vpop.f32.mrf.mxu0
        %1197 = vmatprep.mubr.bf16.mxu0 0
        %1198 = vmatmul.mubr.bf16.gmra.mxu0 %v1132
        %v1199 = vpop.f32.mrf.mxu0
        %v1200 = vadd.f32 0.0, %v1199
        %v1201 = vpop.f32.mrf.mxu0
        %v1202 = vpop.f32.mrf.mxu0
        %v1203 = vadd.f32 0.0, %v1202
        %v1204 = vpop.f32.mrf.mxu0
        %1205 = vmatprep.mubr.bf16.mxu0 0
        %1206 = vmatmul.mubr.bf16.gmra.mxu0 %v1135
        %v1207 = vpop.f32.mrf.mxu0
        %v1208 = vadd.f32 0.0, %v1207
        %v1209 = vpop.f32.mrf.mxu0
        %v1210 = vpop.f32.mrf.mxu0
        %v1211 = vadd.f32 0.0, %v1210
        %v1212 = vpop.f32.mrf.mxu0
        %1213 = vdwg.mxu0
        %vm1214 = vcmask 523264
        %v1215 = vsel %vm1214, %v1184, -inf
        %1216 = vmax.xlane.f32.xlu0 %v1215
        %v1217 = vpop.xlane.xlu0 %1216
        %v1218 = vsel %vm1214, %v1187, -inf
        %1219 = vmax.xlane.f32.xlu0 %v1218
        %v1220 = vpop.xlane.xlu0 %1219
        %v1221 = vsel %vm1214, %v1192, -inf
        %1222 = vmax.xlane.f32.xlu0 %v1221
        %v1223 = vpop.xlane.xlu0 %1222
        %v1224 = vsel %vm1214, %v1195, -inf
        %1225 = vmax.xlane.f32.xlu0 %v1224
        %v1226 = vpop.xlane.xlu0 %1225
        %v1227 = vsel %vm1214, %v1200, -inf
        %1228 = vmax.xlane.f32.xlu0 %v1227
        %v1229 = vpop.xlane.xlu0 %1228
        %v1230 = vsel %vm1214, %v1203, -inf
        %1231 = vmax.xlane.f32.xlu0 %v1230
        %v1232 = vpop.xlane.xlu0 %1231
        %v1233 = vsel %vm1214, %v1208, -inf
        %1234 = vmax.xlane.f32.xlu0 %v1233
        %v1235 = vpop.xlane.xlu0 %1234
        %v1236 = vsel %vm1214, %v1211, -inf
        %1237 = vmax.xlane.f32.xlu0 %v1236
        %v1238 = vpop.xlane.xlu0 %1237
        %v1239 = vsub.f32 %v1184, %v1217
        %v1240 = vsub.f32 %v1187, %v1220
        %v1241 = vsub.f32 %v1192, %v1223
        %v1242 = vsub.f32 %v1195, %v1226
        %v1243 = vsub.f32 %v1200, %v1229
        %v1244 = vsub.f32 %v1203, %v1232
        %v1245 = vsub.f32 %v1208, %v1235
        %v1246 = vsub.f32 %v1211, %v1238
        %v1247 = vmul.f32 %v1239, 1.442695
        %v1248 = vpow.pop %v1247
        %v1249 = vmul.f32 %v1240, 1.442695
        %v1250 = vpow.pop %v1249
        %v1251 = vmul.f32 %v1241, 1.442695
        %v1252 = vpow.pop %v1251
        %v1253 = vmul.f32 %v1242, 1.442695
        %v1254 = vpow.pop %v1253
        %v1255 = vmul.f32 %v1243, 1.442695
        %v1256 = vpow.pop %v1255
        %v1257 = vmul.f32 %v1244, 1.442695
        %v1258 = vpow.pop %v1257
        %v1259 = vmul.f32 %v1245, 1.442695
        %v1260 = vpow.pop %v1259
        %v1261 = vmul.f32 %v1246, 1.442695
        %v1262 = vpow.pop %v1261
        %v1263 = vsel %vm1214, %v1248, 0.0
        %1264 = vadd.xlane.f32.xlu0 %v1263
        %v1265 = vpop.xlane.xlu0 %1264
        %v1266 = vsel %vm1214, %v1250, 0.0
        %1267 = vadd.xlane.f32.xlu0 %v1266
        %v1268 = vpop.xlane.xlu0 %1267
        %v1269 = vsel %vm1214, %v1252, 0.0
        %1270 = vadd.xlane.f32.xlu0 %v1269
        %v1271 = vpop.xlane.xlu0 %1270
        %v1272 = vsel %vm1214, %v1254, 0.0
        %1273 = vadd.xlane.f32.xlu0 %v1272
        %v1274 = vpop.xlane.xlu0 %1273
        %v1275 = vsel %vm1214, %v1256, 0.0
        %1276 = vadd.xlane.f32.xlu0 %v1275
        %v1277 = vpop.xlane.xlu0 %1276
        %v1278 = vsel %vm1214, %v1258, 0.0
        %1279 = vadd.xlane.f32.xlu0 %v1278
        %v1280 = vpop.xlane.xlu0 %1279
        %v1281 = vsel %vm1214, %v1260, 0.0
        %1282 = vadd.xlane.f32.xlu0 %v1281
        %v1283 = vpop.xlane.xlu0 %1282
        %v1284 = vsel %vm1214, %v1262, 0.0
        %1285 = vadd.xlane.f32.xlu0 %v1284
        %v1286 = vpop.xlane.xlu0 %1285
        %v1287 = vrcp.pop %v1265
        %v1288 = vrcp.pop %v1268
        %v1289 = vrcp.pop %v1271
        %v1290 = vrcp.pop %v1274
        %v1291 = vrcp.pop %v1277
        %v1292 = vrcp.pop %v1280
        %v1293 = vrcp.pop %v1283
        %v1294 = vrcp.pop %v1286
        %v1295 = vmul.f32 %v1248, %v1287
        %v1296 = vmul.f32 %v1250, %v1288
        %v1297 = vmul.f32 %v1252, %v1289
        %v1298 = vmul.f32 %v1254, %v1290
        %v1299 = vmul.f32 %v1256, %v1291
        %v1300 = vmul.f32 %v1258, %v1292
        %v1301 = vmul.f32 %v1260, %v1293
        %v1302 = vmul.f32 %v1262, %v1294
        %v1303 = vpack.c.bf16 %v1296, %v1295
        %v1304 = vpack.c.bf16 %v1298, %v1297
        %v1305 = vpack.c.bf16 %v1300, %v1299
        %v1306 = vpack.c.bf16 %v1302, %v1301
        %v1307 = vld [vmem:[#allocation3] sm:$0xf]
        %v1308 = vld [vmem:[#allocation3 + $0x4] sm:$0xf]
        %v1309 = vld [vmem:[#allocation3 + $0x8] sm:$0xf]
        %v1310 = vld [vmem:[#allocation3 + $0xc] sm:$0xf]
        %v1311 = vld [vmem:[#allocation3 + $0x10] sm:$0xf]
        %v1312 = vld [vmem:[#allocation3 + $0x14] sm:$0xf]
        %v1313 = vld [vmem:[#allocation3 + $0x18] sm:$0xf]
        %v1314 = vld [vmem:[#allocation3 + $0x1c] sm:$0xf]
        %v1323 = vunpack.c.l.b16 %v1307
        %v1324 = vunpack.c.l.b16 %v1308
        %v1325 = vunpack.c.l.b16 %v1309
        %v1326 = vunpack.c.l.b16 %v1310
        %v1327 = vunpack.c.l.b16 %v1311
        %v1328 = vunpack.c.l.b16 %v1312
        %v1329 = vunpack.c.l.b16 %v1313
        %v1330 = vunpack.c.l.b16 %v1314
        %v1331 = vpack.c.b16 %v1324, %v1323
        %v1332 = vpack.c.b16 %v1326, %v1325
        %v1333 = vpack.c.b16 %v1328, %v1327
        %v1334 = vpack.c.b16 %v1330, %v1329
        %v1340 = vsel %vm1214, %v1303, 0
        %v1343 = vsel %vm1214, %v1304, 0
        %v1346 = vsel %vm1214, %v1305, 0
        %v1349 = vsel %vm1214, %v1306, 0
        %1351 = vmatprep.subr.bf16.mxu0 0
        %1352 = vmatpush1.bf16.msra.mxu0 0
        %1353 = vmatprep.subr.bf16.mxu0 0
        %1354 = vmatpush1.bf16.msra.mxu0 0
        %1355 = vmatprep.subr.bf16.mxu0 0
        %1356 = vmatpush1.bf16.msra.mxu0 0
        %1357 = vmatprep.subr.bf16.mxu0 0
        %1358 = vmatpush1.bf16.msra.mxu0 0
        %1359 = vmatprep.subr.bf16.mxu0 0
        %1360 = vmatpush1.bf16.msra.mxu0 %v1334
        %1361 = vmatprep.subr.bf16.mxu0 0
        %1362 = vmatpush1.bf16.msra.mxu0 %v1333
        %1363 = vmatprep.subr.bf16.mxu0 0
        %1364 = vmatpush1.bf16.msra.mxu0 %v1332
        %1365 = vmatprep.subr.bf16.mxu0 0
        %1366 = vmatpush1.bf16.msra.mxu0 %v1331
        %1367 = vmatprep.subr.bf16.mxu0 0
        %1368 = vmatpush2.bf16.msra.mxu0 0
        %1369 = vmatprep.subr.bf16.mxu0 0
        %1370 = vmatpush2.bf16.msra.mxu0 0
        %1371 = vmatprep.subr.bf16.mxu0 0
        %1372 = vmatpush2.bf16.msra.mxu0 0
        %1373 = vmatprep.subr.bf16.mxu0 0
        %1374 = vmatpush2.bf16.msra.mxu0 0
        %1375 = vmatprep.subr.bf16.mxu0 0
        %1376 = vmatpush2.bf16.msra.mxu0 0
        %1377 = vmatprep.subr.bf16.mxu0 0
        %1378 = vmatpush2.bf16.msra.mxu0 0
        %1379 = vmatprep.subr.bf16.mxu0 0
        %1380 = vmatpush2.bf16.msra.mxu0 0
        %1381 = vmatprep.subr.bf16.mxu0 0
        %1382 = vmatpush2.bf16.msra.mxu0 0
        %1383 = vmatprep.mubr.bf16.mxu0 0
        %1384 = vmatmul.mubr.bf16.gmra.mxu0 %v1340
        %v1385 = vpop.f32.mrf.mxu0
        %v1386 = vadd.f32 0.0, %v1385
        %v1387 = vpop.f32.mrf.mxu0
        %v1388 = vpop.f32.mrf.mxu0
        %v1389 = vadd.f32 0.0, %v1388
        %v1390 = vpop.f32.mrf.mxu0
        %1391 = vmatprep.mubr.bf16.mxu0 0
        %1392 = vmatmul.mubr.bf16.gmra.mxu0 %v1343
        %v1393 = vpop.f32.mrf.mxu0
        %v1394 = vadd.f32 0.0, %v1393
        %v1395 = vpop.f32.mrf.mxu0
        %v1396 = vpop.f32.mrf.mxu0
        %v1397 = vadd.f32 0.0, %v1396
        %v1398 = vpop.f32.mrf.mxu0
        %1399 = vmatprep.mubr.bf16.mxu0 0
        %1400 = vmatmul.mubr.bf16.gmra.mxu0 %v1346
        %v1401 = vpop.f32.mrf.mxu0
        %v1402 = vadd.f32 0.0, %v1401
        %v1403 = vpop.f32.mrf.mxu0
        %v1404 = vpop.f32.mrf.mxu0
        %v1405 = vadd.f32 0.0, %v1404
        %v1406 = vpop.f32.mrf.mxu0
        %1407 = vmatprep.mubr.bf16.mxu0 0
        %1408 = vmatmul.mubr.bf16.gmra.mxu0 %v1349
        %v1409 = vpop.f32.mrf.mxu0
        %v1410 = vadd.f32 0.0, %v1409
        %v1411 = vpop.f32.mrf.mxu0
        %v1412 = vpop.f32.mrf.mxu0
        %v1413 = vadd.f32 0.0, %v1412
        %v1414 = vpop.f32.mrf.mxu0
        %1415 = vdwg.mxu0
        %1416 = vst.msk [vmem:[#allocation4] sm:$0xff] %vm1124, %v1386
        %1417 = vst.msk [vmem:[#allocation4 + $0x8] sm:$0xff] %vm1124, %v1389
        %1418 = vst.msk [vmem:[#allocation4 + $0x10] sm:$0xff] %vm1124, %v1394
        %1419 = vst.msk [vmem:[#allocation4 + $0x18] sm:$0xff] %vm1124, %v1397
        %1420 = vst.msk [vmem:[#allocation4 + $0x20] sm:$0xff] %vm1124, %v1402
        %1421 = vst.msk [vmem:[#allocation4 + $0x28] sm:$0xff] %vm1124, %v1405
        %1422 = vst.msk [vmem:[#allocation4 + $0x30] sm:$0xff] %vm1124, %v1410
        %1423 = vst.msk [vmem:[#allocation4 + $0x38] sm:$0xff] %vm1124, %v1413
        %v1424 = vld [vmem:[#allocation2] sm:$0xf]
        %v1425 = vld [vmem:[#allocation2 + $0x4] sm:$0xf]
        %v1426 = vld [vmem:[#allocation2 + $0x8] sm:$0xf]
        %v1427 = vld [vmem:[#allocation2 + $0xc] sm:$0xf]
        %v1428 = vld [vmem:[#allocation2 + $0x10] sm:$0xf]
        %v1429 = vld [vmem:[#allocation2 + $0x14] sm:$0xf]
        %v1430 = vld [vmem:[#allocation2 + $0x18] sm:$0xf]
        %v1431 = vld [vmem:[#allocation2 + $0x1c] sm:$0xf]
        %1436 = vrot.lane.b32.xlu0 %v1092, 112
        %v1437 = vpop.permute.xlu0 %1436
        %1438 = vrot.lane.b32.xlu0 %v1093, 112
        %v1439 = vpop.permute.xlu0 %1438
        %1440 = vrot.lane.b32.xlu0 %v1094, 112
        %v1441 = vpop.permute.xlu0 %1440
        %1442 = vrot.lane.b32.xlu0 %v1095, 112
        %v1443 = vpop.permute.xlu0 %1442
        %v1452 = vunpack.c.l.b16 %v1424
        %v1453 = vunpack.c.l.b16 %v1425
        %v1454 = vunpack.c.l.b16 %v1426
        %v1455 = vunpack.c.l.b16 %v1427
        %v1456 = vunpack.c.l.b16 %v1428
        %v1457 = vunpack.c.l.b16 %v1429
        %v1458 = vunpack.c.l.b16 %v1430
        %v1459 = vunpack.c.l.b16 %v1431
        %v1460 = vpack.c.b16 %v1453, %v1452
        %v1461 = vpack.c.b16 %v1455, %v1454
        %v1462 = vpack.c.b16 %v1457, %v1456
        %v1463 = vpack.c.b16 %v1459, %v1458
        %1464 = vrot.lane.b32.xlu0 %v1460, 112
        %v1465 = vpop.permute.xlu0 %1464
        %1466 = vrot.lane.b32.xlu0 %v1461, 112
        %v1467 = vpop.permute.xlu0 %1466
        %1468 = vrot.lane.b32.xlu0 %v1462, 112
        %v1469 = vpop.permute.xlu0 %1468
        %1470 = vrot.lane.b32.xlu0 %v1463, 112
        %v1471 = vpop.permute.xlu0 %1470
        %v1473 = vsel %vm1124, %v1437, 0
        %v1476 = vsel %vm1124, %v1439, 0
        %v1479 = vsel %vm1124, %v1441, 0
        %v1482 = vsel %vm1124, %v1443, 0
        %v1485 = vsel %vm1124, %v1465, 0
        %v1488 = vsel %vm1124, %v1467, 0
        %v1491 = vsel %vm1124, %v1469, 0
        %v1494 = vsel %vm1124, %v1471, 0
        %1496 = vmatprep.subr.bf16.mxu0 0
        %1497 = vmatpush1.bf16.xpose.msra.mxu0 0
        %1498 = vmatprep.subr.bf16.mxu0 0
        %1499 = vmatpush1.bf16.xpose.msra.mxu0 0
        %1500 = vmatprep.subr.bf16.mxu0 0
        %1501 = vmatpush1.bf16.xpose.msra.mxu0 0
        %1502 = vmatprep.subr.bf16.mxu0 0
        %1503 = vmatpush1.bf16.xpose.msra.mxu0 0
        %1504 = vmatprep.subr.bf16.mxu0 0
        %1505 = vmatpush1.bf16.xpose.msra.mxu0 %v1494
        %1506 = vmatprep.subr.bf16.mxu0 0
        %1507 = vmatpush1.bf16.xpose.msra.mxu0 %v1491
        %1508 = vmatprep.subr.bf16.mxu0 0
        %1509 = vmatpush1.bf16.xpose.msra.mxu0 %v1488
        %1510 = vmatprep.subr.bf16.mxu0 0
        %1511 = vmatpush1.bf16.xpose.msra.mxu0 %v1485
        %1512 = vmatprep.subr.bf16.mxu0 0
        %1513 = vmatpush2.bf16.xpose.msra.mxu0 0
        %1514 = vmatprep.subr.bf16.mxu0 0
        %1515 = vmatpush2.bf16.xpose.msra.mxu0 0
        %1516 = vmatprep.subr.bf16.mxu0 0
        %1517 = vmatpush2.bf16.xpose.msra.mxu0 0
        %1518 = vmatprep.subr.bf16.mxu0 0
        %1519 = vmatpush2.bf16.xpose.msra.mxu0 0
        %1520 = vmatprep.subr.bf16.mxu0 0
        %1521 = vmatpush2.bf16.xpose.msra.mxu0 0
        %1522 = vmatprep.subr.bf16.mxu0 0
        %1523 = vmatpush2.bf16.xpose.msra.mxu0 0
        %1524 = vmatprep.subr.bf16.mxu0 0
        %1525 = vmatpush2.bf16.xpose.msra.mxu0 0
        %1526 = vmatprep.subr.bf16.mxu0 0
        %1527 = vmatpush2.bf16.xpose.msra.mxu0 0
        %1528 = vmatprep.mubr.bf16.mxu0 0
        %1529 = vmatmul.mubr.bf16.gmra.mxu0 %v1473
        %v1530 = vpop.f32.mrf.mxu0
        %v1531 = vadd.f32 0.0, %v1530
        %v1532 = vpop.f32.mrf.mxu0
        %v1533 = vpop.f32.mrf.mxu0
        %v1534 = vadd.f32 0.0, %v1533
        %v1535 = vpop.f32.mrf.mxu0
        %1536 = vmatprep.mubr.bf16.mxu0 0
        %1537 = vmatmul.mubr.bf16.gmra.mxu0 %v1476
        %v1538 = vpop.f32.mrf.mxu0
        %v1539 = vadd.f32 0.0, %v1538
        %v1540 = vpop.f32.mrf.mxu0
        %v1541 = vpop.f32.mrf.mxu0
        %v1542 = vadd.f32 0.0, %v1541
        %v1543 = vpop.f32.mrf.mxu0
        %1544 = vmatprep.mubr.bf16.mxu0 0
        %1545 = vmatmul.mubr.bf16.gmra.mxu0 %v1479
        %v1546 = vpop.f32.mrf.mxu0
        %v1547 = vadd.f32 0.0, %v1546
        %v1548 = vpop.f32.mrf.mxu0
        %v1549 = vpop.f32.mrf.mxu0
        %v1550 = vadd.f32 0.0, %v1549
        %v1551 = vpop.f32.mrf.mxu0
        %1552 = vmatprep.mubr.bf16.mxu0 0
        %1553 = vmatmul.mubr.bf16.gmra.mxu0 %v1482
        %v1554 = vpop.f32.mrf.mxu0
        %v1555 = vadd.f32 0.0, %v1554
        %v1556 = vpop.f32.mrf.mxu0
        %v1557 = vpop.f32.mrf.mxu0
        %v1558 = vadd.f32 0.0, %v1557
        %v1559 = vpop.f32.mrf.mxu0
        %1560 = vdwg.mxu0
        %v1561 = vsel %vm1214, %v1531, -inf
        %1562 = vmax.xlane.f32.xlu0 %v1561
        %v1563 = vpop.xlane.xlu0 %1562
        %v1564 = vsel %vm1214, %v1534, -inf
        %1565 = vmax.xlane.f32.xlu0 %v1564
        %v1566 = vpop.xlane.xlu0 %1565
        %v1567 = vsel %vm1214, %v1539, -inf
        %1568 = vmax.xlane.f32.xlu0 %v1567
        %v1569 = vpop.xlane.xlu0 %1568
        %v1570 = vsel %vm1214, %v1542, -inf
        %1571 = vmax.xlane.f32.xlu0 %v1570
        %v1572 = vpop.xlane.xlu0 %1571
        %v1573 = vsel %vm1214, %v1547, -inf
        %1574 = vmax.xlane.f32.xlu0 %v1573
        %v1575 = vpop.xlane.xlu0 %1574
        %v1576 = vsel %vm1214, %v1550, -inf
        %1577 = vmax.xlane.f32.xlu0 %v1576
        %v1578 = vpop.xlane.xlu0 %1577
        %v1579 = vsel %vm1214, %v1555, -inf
        %1580 = vmax.xlane.f32.xlu0 %v1579
        %v1581 = vpop.xlane.xlu0 %1580
        %v1582 = vsel %vm1214, %v1558, -inf
        %1583 = vmax.xlane.f32.xlu0 %v1582
        %v1584 = vpop.xlane.xlu0 %1583
        %v1585 = vsub.f32 %v1531, %v1563
        %v1586 = vsub.f32 %v1534, %v1566
        %v1587 = vsub.f32 %v1539, %v1569
        %v1588 = vsub.f32 %v1542, %v1572
        %v1589 = vsub.f32 %v1547, %v1575
        %v1590 = vsub.f32 %v1550, %v1578
        %v1591 = vsub.f32 %v1555, %v1581
        %v1592 = vsub.f32 %v1558, %v1584
        %v1593 = vmul.f32 %v1585, 1.442695
        %v1594 = vpow.pop %v1593
        %v1595 = vmul.f32 %v1586, 1.442695
        %v1596 = vpow.pop %v1595
        %v1597 = vmul.f32 %v1587, 1.442695
        %v1598 = vpow.pop %v1597
        %v1599 = vmul.f32 %v1588, 1.442695
        %v1600 = vpow.pop %v1599
        %v1601 = vmul.f32 %v1589, 1.442695
        %v1602 = vpow.pop %v1601
        %v1603 = vmul.f32 %v1590, 1.442695
        %v1604 = vpow.pop %v1603
        %v1605 = vmul.f32 %v1591, 1.442695
        %v1606 = vpow.pop %v1605
        %v1607 = vmul.f32 %v1592, 1.442695
        %v1608 = vpow.pop %v1607
        %v1609 = vsel %vm1214, %v1594, 0.0
        %1610 = vadd.xlane.f32.xlu0 %v1609
        %v1611 = vpop.xlane.xlu0 %1610
        %v1612 = vsel %vm1214, %v1596, 0.0
        %1613 = vadd.xlane.f32.xlu0 %v1612
        %v1614 = vpop.xlane.xlu0 %1613
        %v1615 = vsel %vm1214, %v1598, 0.0
        %1616 = vadd.xlane.f32.xlu0 %v1615
        %v1617 = vpop.xlane.xlu0 %1616
        %v1618 = vsel %vm1214, %v1600, 0.0
        %1619 = vadd.xlane.f32.xlu0 %v1618
        %v1620 = vpop.xlane.xlu0 %1619
        %v1621 = vsel %vm1214, %v1602, 0.0
        %1622 = vadd.xlane.f32.xlu0 %v1621
        %v1623 = vpop.xlane.xlu0 %1622
        %v1624 = vsel %vm1214, %v1604, 0.0
        %1625 = vadd.xlane.f32.xlu0 %v1624
        %v1626 = vpop.xlane.xlu0 %1625
        %v1627 = vsel %vm1214, %v1606, 0.0
        %1628 = vadd.xlane.f32.xlu0 %v1627
        %v1629 = vpop.xlane.xlu0 %1628
        %v1630 = vsel %vm1214, %v1608, 0.0
        %1631 = vadd.xlane.f32.xlu0 %v1630
        %v1632 = vpop.xlane.xlu0 %1631
        %v1633 = vrcp.pop %v1611
        %v1634 = vrcp.pop %v1614
        %v1635 = vrcp.pop %v1617
        %v1636 = vrcp.pop %v1620
        %v1637 = vrcp.pop %v1623
        %v1638 = vrcp.pop %v1626
        %v1639 = vrcp.pop %v1629
        %v1640 = vrcp.pop %v1632
        %v1641 = vmul.f32 %v1594, %v1633
        %v1642 = vmul.f32 %v1596, %v1634
        %v1643 = vmul.f32 %v1598, %v1635
        %v1644 = vmul.f32 %v1600, %v1636
        %v1645 = vmul.f32 %v1602, %v1637
        %v1646 = vmul.f32 %v1604, %v1638
        %v1647 = vmul.f32 %v1606, %v1639
        %v1648 = vmul.f32 %v1608, %v1640
        %v1649 = vpack.c.bf16 %v1642, %v1641
        %v1650 = vpack.c.bf16 %v1644, %v1643
        %v1651 = vpack.c.bf16 %v1646, %v1645
        %v1652 = vpack.c.bf16 %v1648, %v1647
        %v1653 = vld [vmem:[#allocation3] sm:$0xf]
        %v1654 = vld [vmem:[#allocation3 + $0x4] sm:$0xf]
        %v1655 = vld [vmem:[#allocation3 + $0x8] sm:$0xf]
        %v1656 = vld [vmem:[#allocation3 + $0xc] sm:$0xf]
        %v1657 = vld [vmem:[#allocation3 + $0x10] sm:$0xf]
        %v1658 = vld [vmem:[#allocation3 + $0x14] sm:$0xf]
        %v1659 = vld [vmem:[#allocation3 + $0x18] sm:$0xf]
        %v1660 = vld [vmem:[#allocation3 + $0x1c] sm:$0xf]
        %v1669 = vunpack.c.l.b16 %v1653
        %v1670 = vunpack.c.l.b16 %v1654
        %v1671 = vunpack.c.l.b16 %v1655
        %v1672 = vunpack.c.l.b16 %v1656
        %v1673 = vunpack.c.l.b16 %v1657
        %v1674 = vunpack.c.l.b16 %v1658
        %v1675 = vunpack.c.l.b16 %v1659
        %v1676 = vunpack.c.l.b16 %v1660
        %v1677 = vpack.c.b16 %v1670, %v1669
        %v1678 = vpack.c.b16 %v1672, %v1671
        %v1679 = vpack.c.b16 %v1674, %v1673
        %v1680 = vpack.c.b16 %v1676, %v1675
        %1681 = vrot.lane.b32.xlu0 %v1677, 112
        %v1682 = vpop.permute.xlu0 %1681
        %1683 = vrot.lane.b32.xlu0 %v1678, 112
        %v1684 = vpop.permute.xlu0 %1683
        %1685 = vrot.lane.b32.xlu0 %v1679, 112
        %v1686 = vpop.permute.xlu0 %1685
        %1687 = vrot.lane.b32.xlu0 %v1680, 112
        %v1688 = vpop.permute.xlu0 %1687
        %v1694 = vsel %vm1214, %v1649, 0
        %v1697 = vsel %vm1214, %v1650, 0
        %v1700 = vsel %vm1214, %v1651, 0
        %v1703 = vsel %vm1214, %v1652, 0
        %1705 = vmatprep.subr.bf16.mxu0 0
        %1706 = vmatpush1.bf16.msra.mxu0 0
        %1707 = vmatprep.subr.bf16.mxu0 0
        %1708 = vmatpush1.bf16.msra.mxu0 0
        %1709 = vmatprep.subr.bf16.mxu0 0
        %1710 = vmatpush1.bf16.msra.mxu0 0
        %1711 = vmatprep.subr.bf16.mxu0 0
        %1712 = vmatpush1.bf16.msra.mxu0 0
        %1713 = vmatprep.subr.bf16.mxu0 0
        %1714 = vmatpush1.bf16.msra.mxu0 %v1688
        %1715 = vmatprep.subr.bf16.mxu0 0
        %1716 = vmatpush1.bf16.msra.mxu0 %v1686
        %1717 = vmatprep.subr.bf16.mxu0 0
        %1718 = vmatpush1.bf16.msra.mxu0 %v1684
        %1719 = vmatprep.subr.bf16.mxu0 0
        %1720 = vmatpush1.bf16.msra.mxu0 %v1682
        %1721 = vmatprep.subr.bf16.mxu0 0
        %1722 = vmatpush2.bf16.msra.mxu0 0
        %1723 = vmatprep.subr.bf16.mxu0 0
        %1724 = vmatpush2.bf16.msra.mxu0 0
        %1725 = vmatprep.subr.bf16.mxu0 0
        %1726 = vmatpush2.bf16.msra.mxu0 0
        %1727 = vmatprep.subr.bf16.mxu0 0
        %1728 = vmatpush2.bf16.msra.mxu0 0
        %1729 = vmatprep.subr.bf16.mxu0 0
        %1730 = vmatpush2.bf16.msra.mxu0 0
        %1731 = vmatprep.subr.bf16.mxu0 0
        %1732 = vmatpush2.bf16.msra.mxu0 0
        %1733 = vmatprep.subr.bf16.mxu0 0
        %1734 = vmatpush2.bf16.msra.mxu0 0
        %1735 = vmatprep.subr.bf16.mxu0 0
        %1736 = vmatpush2.bf16.msra.mxu0 0
        %1737 = vmatprep.mubr.bf16.mxu0 0
        %1738 = vmatmul.mubr.bf16.gmra.mxu0 %v1694
        %v1739 = vpop.f32.mrf.mxu0
        %v1740 = vadd.f32 0.0, %v1739
        %v1741 = vpop.f32.mrf.mxu0
        %v1742 = vpop.f32.mrf.mxu0
        %v1743 = vadd.f32 0.0, %v1742
        %v1744 = vpop.f32.mrf.mxu0
        %1745 = vmatprep.mubr.bf16.mxu0 0
        %1746 = vmatmul.mubr.bf16.gmra.mxu0 %v1697
        %v1747 = vpop.f32.mrf.mxu0
        %v1748 = vadd.f32 0.0, %v1747
        %v1749 = vpop.f32.mrf.mxu0
        %v1750 = vpop.f32.mrf.mxu0
        %v1751 = vadd.f32 0.0, %v1750
        %v1752 = vpop.f32.mrf.mxu0
        %1753 = vmatprep.mubr.bf16.mxu0 0
        %1754 = vmatmul.mubr.bf16.gmra.mxu0 %v1700
        %v1755 = vpop.f32.mrf.mxu0
        %v1756 = vadd.f32 0.0, %v1755
        %v1757 = vpop.f32.mrf.mxu0
        %v1758 = vpop.f32.mrf.mxu0
        %v1759 = vadd.f32 0.0, %v1758
        %v1760 = vpop.f32.mrf.mxu0
        %1761 = vmatprep.mubr.bf16.mxu0 0
        %1762 = vmatmul.mubr.bf16.gmra.mxu0 %v1703
        %v1763 = vpop.f32.mrf.mxu0
        %v1764 = vadd.f32 0.0, %v1763
        %v1765 = vpop.f32.mrf.mxu0
        %v1766 = vpop.f32.mrf.mxu0
        %v1767 = vadd.f32 0.0, %v1766
        %v1768 = vpop.f32.mrf.mxu0
        %1769 = vdwg.mxu0
        %1778 = vrot.lane.b32.xlu0 %v1740, 16
        %v1779 = vpop.permute.xlu0 %1778
        %1780 = vrot.lane.b32.xlu0 %v1743, 16
        %v1781 = vpop.permute.xlu0 %1780
        %1782 = vrot.lane.b32.xlu0 %v1748, 16
        %v1783 = vpop.permute.xlu0 %1782
        %1784 = vrot.lane.b32.xlu0 %v1751, 16
        %v1785 = vpop.permute.xlu0 %1784
        %1786 = vrot.lane.b32.xlu0 %v1756, 16
        %v1787 = vpop.permute.xlu0 %1786
        %1788 = vrot.lane.b32.xlu0 %v1759, 16
        %v1789 = vpop.permute.xlu0 %1788
        %1790 = vrot.lane.b32.xlu0 %v1764, 16
        %v1791 = vpop.permute.xlu0 %1790
        %1792 = vrot.lane.b32.xlu0 %v1767, 16
        %v1793 = vpop.permute.xlu0 %1792
        %vm1802 = vcmask 261248
        %1803 = vst.msk [vmem:[#allocation4] sm:$0xff] %vm1802, %v1779
        %1804 = vst.msk [vmem:[#allocation4 + $0x8] sm:$0xff] %vm1802, %v1781
        %1805 = vst.msk [vmem:[#allocation4 + $0x10] sm:$0xff] %vm1802, %v1783
        %1806 = vst.msk [vmem:[#allocation4 + $0x18] sm:$0xff] %vm1802, %v1785
        %1807 = vst.msk [vmem:[#allocation4 + $0x20] sm:$0xff] %vm1802, %v1787
        %1808 = vst.msk [vmem:[#allocation4 + $0x28] sm:$0xff] %vm1802, %v1789
        %1809 = vst.msk [vmem:[#allocation4 + $0x30] sm:$0xff] %vm1802, %v1791
        %1810 = vst.msk [vmem:[#allocation4 + $0x38] sm:$0xff] %vm1802, %v1793
        %v1811 = vld [vmem:[#allocation4] sm:$0xff]
        %v1812 = vld [vmem:[#allocation4 + $0x8] sm:$0xff]
        %v1813 = vld [vmem:[#allocation4 + $0x10] sm:$0xff]
        %v1814 = vld [vmem:[#allocation4 + $0x18] sm:$0xff]
        %v1815 = vld [vmem:[#allocation4 + $0x20] sm:$0xff]
        %v1816 = vld [vmem:[#allocation4 + $0x28] sm:$0xff]
        %v1817 = vld [vmem:[#allocation4 + $0x30] sm:$0xff]
        %v1818 = vld [vmem:[#allocation4 + $0x38] sm:$0xff]
        %v1819 = vpack.c.bf16 %v1812, %v1811
        %v1820 = vpack.c.bf16 %v1814, %v1813
        %v1821 = vpack.c.bf16 %v1816, %v1815
        %v1822 = vpack.c.bf16 %v1818, %v1817
        %v1823 = vld [vmem:[#allocation13] sm:$0xf]
        %v1824 = vld [vmem:[#allocation13 + $0x4] sm:$0xf]
        %v1825 = vld [vmem:[#allocation13 + $0x8] sm:$0xf]
        %v1826 = vld [vmem:[#allocation13 + $0xc] sm:$0xf]
        %v1827 = vld [vmem:[%s7] sm:$0x1]
        %v1829 = vlaneseq
        %v1830 = vshrl.u32 %v1829, 7
        %v1831 = vsub.s32 0, %v1830
        %v1832 = vrot.slane %v1827, %v1831
        %v1838 = vunpack.c.l.b16 %v1823
        %v1839 = vunpack.c.l.b16 %v1824
        %v1840 = vunpack.c.l.b16 %v1825
        %v1841 = vunpack.c.l.b16 %v1826
        %v1842 = vpack.c.b16 %v1839, %v1838
        %v1843 = vpack.c.b16 %v1841, %v1840
        %v1847 = vsel %vm861, %v1819, 0
        %v1850 = vsel %vm861, %v1820, 0
        %v1853 = vsel %vm861, %v1821, 0
        %v1856 = vsel %vm861, %v1822, 0
        %1858 = vmatprep.subr.bf16.mxu0 0
        %1859 = vmatpush1.bf16.msra.mxu0 0
        %1860 = vmatprep.subr.bf16.mxu0 0
        %1861 = vmatpush1.bf16.msra.mxu0 0
        %1862 = vmatprep.subr.bf16.mxu0 0
        %1863 = vmatpush1.bf16.msra.mxu0 0
        %1864 = vmatprep.subr.bf16.mxu0 0
        %1865 = vmatpush1.bf16.msra.mxu0 0
        %1866 = vmatprep.subr.bf16.mxu0 0
        %1867 = vmatpush1.bf16.msra.mxu0 0
        %1868 = vmatprep.subr.bf16.mxu0 0
        %1869 = vmatpush1.bf16.msra.mxu0 0
        %1870 = vmatprep.subr.bf16.mxu0 0
        %1871 = vmatpush1.bf16.msra.mxu0 %v1843
        %1872 = vmatprep.subr.bf16.mxu0 0
        %1873 = vmatpush1.bf16.msra.mxu0 %v1842
        %1874 = vmatprep.subr.bf16.mxu0 0
        %1875 = vmatpush2.bf16.msra.mxu0 0
        %1876 = vmatprep.subr.bf16.mxu0 0
        %1877 = vmatpush2.bf16.msra.mxu0 0
        %1878 = vmatprep.subr.bf16.mxu0 0
        %1879 = vmatpush2.bf16.msra.mxu0 0
        %1880 = vmatprep.subr.bf16.mxu0 0
        %1881 = vmatpush2.bf16.msra.mxu0 0
        %1882 = vmatprep.subr.bf16.mxu0 0
        %1883 = vmatpush2.bf16.msra.mxu0 0
        %1884 = vmatprep.subr.bf16.mxu0 0
        %1885 = vmatpush2.bf16.msra.mxu0 0
        %1886 = vmatprep.subr.bf16.mxu0 0
        %1887 = vmatpush2.bf16.msra.mxu0 0
        %1888 = vmatprep.subr.bf16.mxu0 0
        %1889 = vmatpush2.bf16.msra.mxu0 0
        %1890 = vmatprep.mubr.bf16.mxu0 0
        %1891 = vmatmul.mubr.bf16.gmra.mxu0 %v1847
        %v1892 = vpop.f32.mrf.mxu0
        %v1893 = vadd.f32 %v1832, %v1892
        %v1894 = vpop.f32.mrf.mxu0
        %v1895 = vpop.f32.mrf.mxu0
        %v1896 = vadd.f32 %v1832, %v1895
        %v1897 = vpop.f32.mrf.mxu0
        %1898 = vmatprep.mubr.bf16.mxu0 0
        %1899 = vmatmul.mubr.bf16.gmra.mxu0 %v1850
        %v1900 = vpop.f32.mrf.mxu0
        %v1901 = vadd.f32 %v1832, %v1900
        %v1902 = vpop.f32.mrf.mxu0
        %v1903 = vpop.f32.mrf.mxu0
        %v1904 = vadd.f32 %v1832, %v1903
        %v1905 = vpop.f32.mrf.mxu0
        %1906 = vmatprep.mubr.bf16.mxu0 0
        %1907 = vmatmul.mubr.bf16.gmra.mxu0 %v1853
        %v1908 = vpop.f32.mrf.mxu0
        %v1909 = vadd.f32 %v1832, %v1908
        %v1910 = vpop.f32.mrf.mxu0
        %v1911 = vpop.f32.mrf.mxu0
        %v1912 = vadd.f32 %v1832, %v1911
        %v1913 = vpop.f32.mrf.mxu0
        %1914 = vmatprep.mubr.bf16.mxu0 0
        %1915 = vmatmul.mubr.bf16.gmra.mxu0 %v1856
        %v1916 = vpop.f32.mrf.mxu0
        %v1917 = vadd.f32 %v1832, %v1916
        %v1918 = vpop.f32.mrf.mxu0
        %v1919 = vpop.f32.mrf.mxu0
        %v1920 = vadd.f32 %v1832, %v1919
        %v1921 = vpop.f32.mrf.mxu0
        %1922 = vdwg.mxu0
        %v1923 = vadd.f32 %v1893, %v853
        %v1924 = vadd.f32 %v1896, %v854
        %v1925 = vadd.f32 %v1901, %v855
        %v1926 = vadd.f32 %v1904, %v856
        %v1927 = vadd.f32 %v1909, %v857
        %v1928 = vadd.f32 %v1912, %v858
        %v1929 = vadd.f32 %v1917, %v859
        %v1930 = vadd.f32 %v1920, %v860
        %1931 = vst.msk [vmem:[%s405] sm:$0xff] %vm861, %v1923
        %1932 = vst.msk [vmem:[%s405 + $0x8] sm:$0xff] %vm861, %v1924
        %1933 = vst.msk [vmem:[%s405 + $0x10] sm:$0xff] %vm861, %v1925
        %1934 = vst.msk [vmem:[%s405 + $0x18] sm:$0xff] %vm861, %v1926
        %1935 = vst.msk [vmem:[%s405 + $0x20] sm:$0xff] %vm861, %v1927
        %1936 = vst.msk [vmem:[%s405 + $0x28] sm:$0xff] %vm861, %v1928
        %1937 = vst.msk [vmem:[%s405 + $0x30] sm:$0xff] %vm861, %v1929
        %1938 = vst.msk [vmem:[%s405 + $0x38] sm:$0xff] %vm861, %v1930
        %s1939 = smul.u32 8, %s29
        %p1940 = scmp.lt.s32.totalorder %s28, 1
        %s1941 = scalar_select %p1940, %s28, 1
        %p1942 = scmp.lt.s32.totalorder %s1939, 7
        %s1943 = scalar_select %p1942, %s1939, 7
        %s1944 = smul.addr %s1941, 8
        %s1945 = sadd.s32 %s1943, %s1944
        %s1946 = smul.addr %s1945, 8
        %s1947 = scalar_lea.vmem %s8, %s1946
        // Predicated region
        $region77: #{tpu_custom_call.1} parent=51 // pred_check
          %p1948 = pneg %p229
        $region78: #{tpu_custom_call.1} parent=51 // pred_check_branch
          %1950 = sbr.rel (%p1948) target = $region80
        $region79: #{tpu_custom_call.1} parent=51 // pred_region
          %s1951 = smul.u32 8, %s29
        $region80: #{tpu_custom_call.1} parent=51 // pred_fallthru
          _
      $region52: #{tpu_custom_call.1} parent=5 // pred_fallthru
        _
      %p1952 = scmp.le.s32.totalorder 2, %s19
      // Predicated region
      $region81: #{tpu_custom_call.1} parent=5 // pred_check
        %p1953 = pneg %p1952
      $region82: #{tpu_custom_call.1} parent=5 // pred_check_branch
        %1955 = sbr.rel (%p1953) target = $region84
      $region83: #{tpu_custom_call.1} parent=5 // pred_region
        %s1956 = ssub.s32 %s19, 2
        // Predicated region
        $region85: #{tpu_custom_call.1} parent=83 // pred_check
          %p1957 = pneg %p235
        $region86: #{tpu_custom_call.1} parent=83 // pred_check_branch
          %1959 = sbr.rel (%p1957) target = $region88
        $region87: #{tpu_custom_call.1} parent=83 // pred_region
          %s1960 = smul.u32 8, %s31
          %p1961 = scmp.lt.s32.totalorder %s30, 1
          %s1962 = scalar_select %p1961, %s30, 1
          %p1963 = scmp.lt.s32.totalorder %s1960, 7
          %s1964 = scalar_select %p1963, %s1960, 7
          %s1965 = smul.addr %s1962, 8
          %s1966 = sadd.s32 %s1964, %s1965
          %s1967 = smul.addr %s1966, 8
          %s1968 = scalar_lea.vmem %s8, %s1967
        $region88: #{tpu_custom_call.1} parent=83 // pred_fallthru
          _
      $region84: #{tpu_custom_call.1} parent=5 // pred_fallthru
        _
    $region6: #{tpu_custom_call.1} parent=1 // loop_footer
      %s23 = sadd.s32 1, %s19
    $region7: #{tpu_custom_call.1} parent=1 // loop_footer_branch
      %18 = sbr.rel target = $region3
    $region8: #{tpu_custom_call.1} parent=1 // loop_exit
      _
    %1969 = vsyncpa [#allocation7], 1
    %s1970 = scalar_lea.sflag [#allocation7], 1
    %1971 = vsyncpa %s1970, 1
    %1972 = vsyncpa [#allocation9], 1
    %1973 = vsyncpa [#allocation12], 1

</llo_original>
